<compile_context>
chip_gen: v6e
topology: v6e:2x2x1
jax: 0.10.0
libtpu: 0.0.40
codegen_flags: <defaults>
</compile_context>

<pallas_src>
import jax
import jax.numpy as jnp
import numpy as np
from jax import lax
from jax.experimental import pallas as pl
from jax.experimental.pallas import tpu as pltpu

EPS = 1e-5
LANES = 128


def _round_up(x, m):
    return ((x + m - 1) // m) * m


def _pad_axis(a, axis, size):
    if a.shape[axis] == size:
        return a
    pads = [(0, 0)] * a.ndim
    pads[axis] = (0, size - a.shape[axis])
    return jnp.pad(a, pads)


def _vmem_limit_bytes():
    # Per-generation VMEM budget (~75% of physical).  v5e/v6e: 128 MiB -> 96,
    # v7x: 64 MiB -> 48.  Conservative fallback if the query is unavailable.
    try:
        cap = int(pltpu.get_tpu_info().vmem_capacity_bytes)
    except Exception:
        cap = 64 * 1024 * 1024
    return min(max(cap * 3 // 4, 32 * 1024 * 1024), 100 * 1024 * 1024)


def _pick_row_tile(m, cp, vmem_bytes):
    """Largest row tile dividing m that fits a conservative VMEM budget for
    ~4 double-buffered (TM, CP) row streams and leaves >=2 grid steps when
    possible (v7x has 2 TensorCores to feed)."""
    budget_rows = max(8, vmem_bytes // (32 * cp))
    single = None
    for t in (4096, 2048, 1024, 512, 256, 128, 64, 32, 16, 8):
        if t <= budget_rows and m % t == 0:
            if m // t >= 2:
                return t
            if single is None:
                single = t
    return single if single is not None else m


# ----------------------------- Pallas kernels ------------------------------

def _make_stage1_kernel(stride, Ho, Wo, KC, K1, CP, proj):
    """conv1 3x3/stride (+ fused 1x1 projection) as a single concat-K MXU
    pass over phase-decomposed bf16 input, plus BN partial statistics."""
    HW = Ho * Wo
    KTAP = 9 * KC

    def kernel(*refs):
        if proj:
            (xph_ref, w_ref, y1_ref, g_ref,
             s1_ref, q1_ref, sg_ref, qg_ref, stage_ref) = refs
        else:
            (xph_ref, w_ref, y1_ref, s1_ref, q1_ref, stage_ref) = refs

        # Keep the lane-padding tail of the concat-K buffer finite: matching
        # weight rows are zero, but NaN garbage * 0 would poison the MXU
        # accumulator.  Done per step: scratch is per-core under megacore.
        if K1 > KTAP:
            stage_ref[:, :, KTAP:] = jnp.zeros((Ho, Wo, K1 - KTAP),
                                               jnp.bfloat16)

        # Stage the 9 taps once (already bf16), tap-major along K.
        for kh in range(3):
            for kw in range(3):
                t = kh * 3 + kw
                ph = (kh % stride) * stride + (kw % stride)
                oh, ow = kh // stride, kw // stride
                stage_ref[:, :, t * KC:(t + 1) * KC] = (
                    xph_ref[ph, oh:oh + Ho, ow:ow + Wo, :])

        # One MXU pass over the concatenated contraction dim.  When the block
        # has a projection shortcut, its 1x1 conv shares the pass: extra CP
        # output columns whose weights sit at the centre-tap rows.
        lhs = stage_ref[...].reshape(HW, K1)
        out = jnp.dot(lhs, w_ref[...], preferred_element_type=jnp.float32)

        acc = out[:, :CP] if proj else out
        y1_ref[0] = acc.astype(jnp.bfloat16)
        s1_ref[0] = jnp.sum(acc, axis=0, keepdims=True)
        q1_ref[0] = jnp.sum(acc * acc, axis=0, keepdims=True)
        if proj:
            g = out[:, CP:]
            g_ref[0] = g.astype(jnp.bfloat16)
            sg_ref[0] = jnp.sum(g, axis=0, keepdims=True)
            qg_ref[0] = jnp.sum(g * g, axis=0, keepdims=True)

    return kernel


def _make_stage2_kernel(Ho, Wo, Wpad, CP):
    """BN1 affine + ReLU into a bf16 halo scratch, conv2 (3x3, stride 1) as a
    single concat-K (9*CP) MXU pass, plus BN2 partial statistics."""
    HW = Ho * Wo
    K2 = 9 * CP

    def kernel(y1_ref, s1_ref, b1_ref, w2_ref, y2_ref, sum2_ref, sq2_ref,
               ypad_ref, stage_ref):
        # Zero only the 1-element halo border (interior is fully overwritten
        # below).  Per-step so it stays correct under megacore grid splits.
        zrow = jnp.zeros((1, Wpad, CP), jnp.bfloat16)
        zcol = jnp.zeros((Ho, 1, CP), jnp.bfloat16)
        ypad_ref[0:1, :, :] = zrow
        ypad_ref[Ho + 1:Ho + 2, :, :] = zrow
        ypad_ref[1:Ho + 1, 0:1, :] = zcol
        ypad_ref[1:Ho + 1, Wo + 1:Wo + 2, :] = zcol

        # BN1 affine + ReLU in f32, one cast to bf16 into the halo interior.
        y1 = jnp.maximum(
            y1_ref[0].astype(jnp.float32) * s1_ref[...] + b1_ref[...], 0.0)
        ypad_ref[1:Ho + 1, 1:Wo + 1, :] = (
            y1.reshape(Ho, Wo, CP).astype(jnp.bfloat16))

        # Stage the 9 shifted windows once (lane-aligned CP slabs), then one
        # MXU pass with K = 9*CP accumulating internally.
        for kh in range(3):
            for kw in range(3):
                t = kh * 3 + kw
                stage_ref[:, :, t * CP:(t + 1) * CP] = (
                    ypad_ref[kh:kh + Ho, kw:kw + Wo, :])

        acc = jnp.dot(stage_ref[...].reshape(HW, K2), w2_ref[...],
                      preferred_element_type=jnp.float32)
        y2_ref[0] = acc.astype(jnp.bfloat16)
        sum2_ref[0] = jnp.sum(acc, axis=0, keepdims=True)
        sq2_ref[0] = jnp.sum(acc * acc, axis=0, keepdims=True)

    return kernel


def _make_out_proj_kernel():
    def kernel(y2_ref, s2_ref, b2_ref, g_ref, sg_ref, bg_ref, o_ref):
        main = y2_ref[...].astype(jnp.float32) * s2_ref[...] + b2_ref[...]
        short = g_ref[...].astype(jnp.float32) * sg_ref[...] + bg_ref[...]
        o_ref[...] = jnp.maximum(main + short, 0.0)
    return kernel


def _make_out_id_kernel(Cid, CP):
    def kernel(y2_ref, s2_ref, b2_ref, xid_ref, o_ref):
        main = y2_ref[...].astype(jnp.float32) * s2_ref[...] + b2_ref[...]
        if Cid == CP:
            o_ref[...] = jnp.maximum(main + xid_ref[...], 0.0)
        else:
            # Identity shortcut arrives un-padded; only its Cid lanes matter
            # (padded lanes are BN-zeroed and sliced away by the wrapper).
            o_ref[...] = jnp.maximum(main, 0.0)
            o_ref[:, :Cid] = jnp.maximum(main[:, :Cid] + xid_ref[...], 0.0)
    return kernel


# ------------------------------- JAX glue ----------------------------------

def _phase_decompose(x_nhwc, stride):
    """Zero-pad (pad=1) and split into stride*stride phases so every 3x3 tap
    is a static contiguous window inside the kernel (x copied ~once)."""
    N, H, W, C = x_nhwc.shape
    Ho = (H - 1) // stride + 1
    Wo = (W - 1) // stride + 1
    om = (3 - 1) // stride
    Hq, Wq = Ho + om, Wo + om
    PH, PW = stride * Hq, stride * Wq
    xp = jnp.pad(x_nhwc, ((0, 0), (1, PH - H - 1), (1, PW - W - 1), (0, 0)))
    phases = [xp[:, a::stride, b::stride, :][:, :Hq, :Wq, :]
              for a in range(stride) for b in range(stride)]
    xph = jnp.stack(phases, axis=1).reshape(N * stride * stride, Hq, Wq, C)
    return xph, Ho, Wo, Hq, Wq


def _bn_affine(sum_parts, sq_parts, count, gamma, beta):
    # Tiny per-channel finalize of the two-pass training BN.
    # TODO(synk): switch to Welford-style merging of the per-image partials
    # for very large M (E[x^2]-E[x]^2 cancellation in f32).
    s = jnp.sum(sum_parts[:, 0, :], axis=0)
    q = jnp.sum(sq_parts[:, 0, :], axis=0)
    mean = s / count
    var = jnp.maximum(q / count - mean * mean, 0.0)
    scale = gamma * lax.rsqrt(var + EPS)
    shift = beta - mean * scale
    return scale[None, :], shift[None, :]


def init_params(key, inplanes, planes, stride):
    ks = jax.random.split(key, 9)
    p = dict(
        w1=0.1 * jax.random.normal(ks[0], (planes, inplanes, 3, 3), jnp.float32),
        g1=1.0 + 0.1 * jax.random.normal(ks[1], (planes,), jnp.float32),
        b1=0.1 * jax.random.normal(ks[2], (planes,), jnp.float32),
        w2=0.1 * jax.random.normal(ks[3], (planes, planes, 3, 3), jnp.float32),
        g2=1.0 + 0.1 * jax.random.normal(ks[4], (planes,), jnp.float32),
        b2=0.1 * jax.random.normal(ks[5], (planes,), jnp.float32),
    )
    if stride > 1 or inplanes != planes:
        p.update(
            wg=0.1 * jax.random.normal(ks[6], (planes, inplanes, 1, 1), jnp.float32),
            gg=1.0 + 0.1 * jax.random.normal(ks[7], (planes,), jnp.float32),
            bg=0.1 * jax.random.normal(ks[8], (planes,), jnp.float32),
        )
    return p


def residual_block_forward(x_nchw, params, stride):
    x = jnp.transpose(x_nchw, (0, 2, 3, 1)).astype(jnp.float32)   # NCHW->NHWC
    N, H, W, Cin0 = x.shape
    planes = params["w1"].shape[0]
    CP = _round_up(planes, LANES)          # lane-dense output channels
    KC = _round_up(Cin0, 8)                # sublane-aligned input channels
    KTAP = 9 * KC
    K1 = _round_up(KTAP, LANES)            # lane-aligned concat-K for conv1
    proj = stride > 1 or Cin0 != planes

    vmem_limit = _vmem_limit_bytes()
    cparams = pltpu.CompilerParams(dimension_semantics=("parallel",),
                                   vmem_limit_bytes=vmem_limit)

    # Convs consume x in bf16; the original f32 x is kept only for the
    # identity shortcut add.
    x_bf = _pad_axis(x, 3, KC).astype(jnp.bfloat16)
    xph, Ho, Wo, Hq, Wq = _phase_decompose(x_bf, stride)
    HW = Ho * Wo
    M = N * HW
    s2 = stride * stride

    # ---- weights: tap-major concat-K matrices, channel-padded, bf16 --------
    w1 = jnp.transpose(params["w1"], (2, 3, 1, 0)).reshape(9, Cin0, planes)
    w1 = _pad_axis(_pad_axis(w1, 1, KC), 2, CP).reshape(KTAP, CP)
    wcat = _pad_axis(w1, 0, K1)                            # (K1, CP)
    if proj:
        wg = jnp.transpose(params["wg"].reshape(planes, Cin0), (1, 0))
        wg = _pad_axis(_pad_axis(wg, 0, KC), 1, CP)        # (KC, CP)
        # The 1x1 projection's input is exactly the centre tap (kh=kw=1 -> 4).
        wg_embed = jnp.pad(wg, ((4 * KC, K1 - 5 * KC), (0, 0)))
        wcat = jnp.concatenate([wcat, wg_embed], axis=1)   # (K1, 2*CP)
    wcat = wcat.astype(jnp.bfloat16)
    # TODO(synk): hold wcat/w2 single-buffered (pl.Buffered(1)) to save VMEM
    # on v7x once verified; they are re-fetched double-buffered here.

    w2 = jnp.transpose(params["w2"], (2, 3, 1, 0)).reshape(9, planes, planes)
    w2 = _pad_axis(_pad_axis(w2, 1, CP), 2, CP).reshape(9 * CP, CP)
    w2 = w2.astype(jnp.bfloat16)

    # NOTE: gamma/beta are deliberately ZERO-padded: padded channels then get
    # scale=0 / shift=0 and stay exactly 0 through BN/ReLU, never leaking into
    # the pre-slice output.  Do not change this to ones-padding.
    g1 = _pad_axis(params["g1"], 0, CP); b1 = _pad_axis(params["b1"], 0, CP)
    g2 = _pad_axis(params["g2"], 0, CP); b2 = _pad_axis(params["b2"], 0, CP)

    CPo = 2 * CP if proj else CP

    # ---- stage 1: conv1 (3x3/stride) [+ fused 1x1 projection] + stats ------
    # TODO(synk): additionally tile Ho with an explicit halo DMA for very
    # large feature maps so whole-image blocks are not required on v7x.
    img_spec = pl.BlockSpec((1, HW, CP), lambda i: (i, 0, 0))
    stats_spec = pl.BlockSpec((1, 1, CP), lambda i: (i, 0, 0))
    s1_in_specs = [
        pl.BlockSpec((s2, Hq, Wq, KC), lambda i: (i, 0, 0, 0)),
        pl.BlockSpec((K1, CPo), lambda i: (0, 0)),
    ]
    s1_scratch = [pltpu.VMEM((Ho, Wo, K1), jnp.bfloat16)]
    s1_cost = pl.CostEstimate(
        flops=int(2 * M * K1 * CPo), transcendentals=0,
        bytes_accessed=int(2 * xph.size + 2 * wcat.size
                           + 2 * M * CP * (2 if proj else 1)))

    if proj:
        y1raw, graw, sum1, sq1, sumg, sqg = pl.pallas_call(
            _make_stage1_kernel(stride, Ho, Wo, KC, K1, CP, True),
            grid=(N,),
            in_specs=s1_in_specs,
            out_specs=(img_spec, img_spec, stats_spec, stats_spec,
                       stats_spec, stats_spec),
            out_shape=(
                jax.ShapeDtypeStruct((N, HW, CP), jnp.bfloat16),
                jax.ShapeDtypeStruct((N, HW, CP), jnp.bfloat16),
                jax.ShapeDtypeStruct((N, 1, CP), jnp.float32),
                jax.ShapeDtypeStruct((N, 1, CP), jnp.float32),
                jax.ShapeDtypeStruct((N, 1, CP), jnp.float32),
                jax.ShapeDtypeStruct((N, 1, CP), jnp.float32),
            ),
            scratch_shapes=s1_scratch,
            compiler_params=cparams,
            cost_estimate=s1_cost,
        )(xph, wcat)
        scaleg, shiftg = _bn_affine(sumg, sqg, M,
                                    _pad_axis(params["gg"], 0, CP),
                                    _pad_axis(params["bg"], 0, CP))
    else:
        y1raw, sum1, sq1 = pl.pallas_call(
            _make_stage1_kernel(stride, Ho, Wo, KC, K1, CP, False),
            grid=(N,),
            in_specs=s1_in_specs,
            out_specs=(img_spec, stats_spec, stats_spec),
            out_shape=(
                jax.ShapeDtypeStruct((N, HW, CP), jnp.bfloat16),
                jax.ShapeDtypeStruct((N, 1, CP), jnp.float32),
                jax.ShapeDtypeStruct((N, 1, CP), jnp.float32),
            ),
            scratch_shapes=s1_scratch,
            compiler_params=cparams,
            cost_estimate=s1_cost,
        )(xph, wcat)

    scale1, shift1 = _bn_affine(sum1, sq1, M, g1, b1)

    # ---- stage 2: BN1-apply + ReLU + conv2 (3x3/1) + BN2 stats -------------
    Wpad = _round_up(Wo + 2, 8)
    vec_spec = pl.BlockSpec((1, CP), lambda i: (0, 0))
    y2raw, sum2, sq2 = pl.pallas_call(
        _make_stage2_kernel(Ho, Wo, Wpad, CP),
        grid=(N,),
        in_specs=[
            img_spec, vec_spec, vec_spec,
            pl.BlockSpec((9 * CP, CP), lambda i: (0, 0)),
        ],
        out_specs=(img_spec, stats_spec, stats_spec),
        out_shape=(
            jax.ShapeDtypeStruct((N, HW, CP), jnp.bfloat16),
            jax.ShapeDtypeStruct((N, 1, CP), jnp.float32),
            jax.ShapeDtypeStruct((N, 1, CP), jnp.float32),
        ),
        scratch_shapes=[pltpu.VMEM((Ho + 2, Wpad, CP), jnp.bfloat16),
                        pltpu.VMEM((Ho, Wo, 9 * CP), jnp.bfloat16)],
        compiler_params=cparams,
        cost_estimate=pl.CostEstimate(
            flops=int(2 * M * 9 * CP * CP), transcendentals=0,
            bytes_accessed=int(4 * M * CP + 2 * w2.size)),
    )(y1raw, scale1, shift1, w2)

    scale2, shift2 = _bn_affine(sum2, sq2, M, g2, b2)

    # ---- stage 3: BN2 (+BNg) apply + residual add + ReLU, row-tiled ---------
    TM = _pick_row_tile(M, CP, vmem_limit)
    row_spec = pl.BlockSpec((TM, CP), lambda i: (i, 0))
    cvec_spec = pl.BlockSpec((1, CP), lambda i: (0, 0))
    y2flat = y2raw.reshape(M, CP)
    if proj:
        kern = _make_out_proj_kernel()
        ins = (y2flat, scale2, shift2, graw.reshape(M, CP), scaleg, shiftg)
        in_specs = [row_spec, cvec_spec, cvec_spec,
                    row_spec, cvec_spec, cvec_spec]
        s3_bytes = 2 * 2 * M * CP + 4 * M * CP
    else:
        kern = _make_out_id_kernel(Cin0, CP)
        ins = (y2flat, scale2, shift2, x.reshape(M, Cin0))
        in_specs = [row_spec, cvec_spec, cvec_spec,
                    pl.BlockSpec((TM, Cin0), lambda i: (i, 0))]
        s3_bytes = 2 * M * CP + 4 * M * Cin0 + 4 * M * CP

    out = pl.pallas_call(
        kern,
        grid=(M // TM,),
        in_specs=in_specs,
        out_specs=pl.BlockSpec((TM, CP), lambda i: (i, 0)),
        out_shape=jax.ShapeDtypeStruct((M, CP), jnp.float32),
        compiler_params=cparams,
        cost_estimate=pl.CostEstimate(flops=int(8 * M * CP), transcendentals=0,
                                      bytes_accessed=int(s3_bytes)),
    )(*ins)

    out = out[:, :planes].reshape(N, Ho, Wo, planes)
    return jnp.transpose(out, (0, 3, 1, 2))           # NHWC -> NCHW


# ---------------------------- pure-JAX reference ----------------------------

def _conv_ref(x_nhwc, w_oihw, stride, pad):
    w = jnp.transpose(w_oihw, (2, 3, 1, 0))
    return lax.conv_general_dilated(
        x_nhwc, w, (stride, stride), ((pad, pad), (pad, pad)),
        dimension_numbers=("NHWC", "HWIO", "NHWC"),
        precision=lax.Precision.HIGHEST)


def _bn_ref(y, gamma, beta):
    mu = jnp.mean(y, axis=(0, 1, 2))
    var = jnp.mean((y - mu) ** 2, axis=(0, 1, 2))
    return (y - mu) * lax.rsqrt(var + EPS) * gamma + beta


def residual_block_ref(x_nchw, params, stride):
    x = jnp.transpose(x_nchw, (0, 2, 3, 1)).astype(jnp.float32)
    planes = params["w1"].shape[0]
    f = jnp.maximum(_bn_ref(_conv_ref(x, params["w1"], stride, 1),
                            params["g1"], params["b1"]), 0.0)
    f = _bn_ref(_conv_ref(f, params["w2"], 1, 1), params["g2"], params["b2"])
    if stride > 1 or x.shape[-1] != planes:
        g = _bn_ref(_conv_ref(x, params["wg"], stride, 0),
                    params["gg"], params["bg"])
    else:
        g = x
    return jnp.transpose(jnp.maximum(f + g, 0.0), (0, 3, 1, 2))


# ----------------------------------- main -----------------------------------

if __name__ == "__main__":
    key = jax.random.PRNGKey(0)
    kx, kpa, kpb = jax.random.split(key, 3)

    def _chan_stats(a):
        a = np.asarray(a)
        return a.mean(axis=(0, 2, 3)), a.std(axis=(0, 2, 3))

    # Case 1: projection shortcut (stride=2, inplanes=4 -> planes=8)
    x1 = jax.random.normal(kx, (2, 4, 16, 16), jnp.float32)
    pa = init_params(kpa, 4, 8, 2)
    out1 = jax.block_until_ready(residual_block_forward(x1, pa, 2))
    ref1 = residual_block_ref(x1, pa, 2)
    assert out1.shape == (2, 8, 8, 8)
    # bf16 MXU inputs + bf16 intermediates -> loose elementwise tolerance,
    # backed by a tighter per-channel statistics check (catches BN drift).
    np.testing.assert_allclose(np.asarray(out1), np.asarray(ref1),
                               atol=8e-2, rtol=5e-2)
    mk, sk = _chan_stats(out1); mr, sr = _chan_stats(ref1)
    np.testing.assert_allclose(mk, mr, atol=2.5e-2)
    np.testing.assert_allclose(sk, sr, atol=2.5e-2)

    # Case 2: identity shortcut (stride=1, inplanes == planes == 8)
    x2 = jax.random.normal(kx, (2, 8, 16, 16), jnp.float32)
    pb = init_params(kpb, 8, 8, 1)
    out2 = jax.block_until_ready(residual_block_forward(x2, pb, 1))
    ref2 = residual_block_ref(x2, pb, 1)
    assert out2.shape == (2, 8, 16, 16)
    np.testing.assert_allclose(np.asarray(out2), np.asarray(ref2),
                               atol=8e-2, rtol=5e-2)
    mk, sk = _chan_stats(out2); mr, sr = _chan_stats(ref2)
    np.testing.assert_allclose(mk, mr, atol=2.5e-2)
    np.testing.assert_allclose(sk, sr, atol=2.5e-2)

    print("KERNEL_OK")
</pallas_src>

<mosaic_0001>
module attributes {stable_mosaic.version = 11 : i64} {
  func.func @kernel(%arg0: i32, %arg1: memref<4x9x9x8xbf16, #tpu.memory_space<vmem>>, %arg2: memref<128x256xbf16, #tpu.memory_space<vmem>>, %arg3: memref<1x64x128xbf16, #tpu.memory_space<vmem>>, %arg4: memref<1x64x128xbf16, #tpu.memory_space<vmem>>, %arg5: memref<1x1x128xf32, #tpu.memory_space<vmem>>, %arg6: memref<1x1x128xf32, #tpu.memory_space<vmem>>, %arg7: memref<1x1x128xf32, #tpu.memory_space<vmem>>, %arg8: memref<1x1x128xf32, #tpu.memory_space<vmem>>, %arg9: memref<8x8x128xbf16, #tpu.memory_space<vmem>>) attributes {dimension_semantics = [#tpu.dimension_semantics<parallel>], iteration_bounds = array<i64: 2>, scalar_prefetch = 0 : i64, scratch_operands = 1 : i64, tpu.core_type = #tpu.core_type<tc>, window_params = [{transform_indices = @transform_0, window_bounds = array<i64: 4, 9, 9, 8>}, {pipeline_mode = #tpu.pipeline_mode<synchronous>, transform_indices = @transform_1, window_bounds = array<i64: 128, 256>}, {transform_indices = @transform_2, window_bounds = array<i64: 1, 64, 128>}, {transform_indices = @transform_3, window_bounds = array<i64: 1, 64, 128>}, {transform_indices = @transform_4, window_bounds = array<i64: 1, 1, 128>}, {transform_indices = @transform_5, window_bounds = array<i64: 1, 1, 128>}, {transform_indices = @transform_6, window_bounds = array<i64: 1, 1, 128>}, {transform_indices = @transform_7, window_bounds = array<i64: 1, 1, 128>}]} {
    %cst = arith.constant 0.000000e+00 : bf16
    %0 = vector.broadcast %cst : bf16 to vector<8x8x56xbf16>
    %c0 = arith.constant 0 : index
    %c0_0 = arith.constant 0 : index
    %c72 = arith.constant 72 : index
    %1 = vector.load %arg9[%c0, %c0_0, %c72] : memref<8x8x128xbf16, #tpu.memory_space<vmem>>, vector<8x8x56xbf16>
    tpu.vector_store %arg9[%c0, %c0_0, %c72], %0 {strides = array<i32>} : memref<8x8x128xbf16, #tpu.memory_space<vmem>>, vector<8x8x56xbf16>,
    %c0_1 = arith.constant 0 : index
    %c0_2 = arith.constant 0 : index
    %c0_3 = arith.constant 0 : index
    %c0_4 = arith.constant 0 : index
    %2 = vector.load %arg1[%c0_1, %c0_2, %c0_3, %c0_4] : memref<4x9x9x8xbf16, #tpu.memory_space<vmem>>, vector<1x8x8x8xbf16>
    %3 = vector.shape_cast %2 : vector<1x8x8x8xbf16> to vector<8x8x8xbf16>
    %c0_5 = arith.constant 0 : index
    %c0_6 = arith.constant 0 : index
    %c0_7 = arith.constant 0 : index
    %4 = vector.load %arg9[%c0_5, %c0_6, %c0_7] : memref<8x8x128xbf16, #tpu.memory_space<vmem>>, vector<8x8x8xbf16>
    tpu.vector_store %arg9[%c0_5, %c0_6, %c0_7], %3 {strides = array<i32>} : memref<8x8x128xbf16, #tpu.memory_space<vmem>>, vector<8x8x8xbf16>,
    %c1 = arith.constant 1 : index
    %c0_8 = arith.constant 0 : index
    %c0_9 = arith.constant 0 : index
    %c0_10 = arith.constant 0 : index
    %5 = vector.load %arg1[%c1, %c0_8, %c0_9, %c0_10] : memref<4x9x9x8xbf16, #tpu.memory_space<vmem>>, vector<1x8x8x8xbf16>
    %6 = vector.shape_cast %5 : vector<1x8x8x8xbf16> to vector<8x8x8xbf16>
    %c0_11 = arith.constant 0 : index
    %c0_12 = arith.constant 0 : index
    %c8 = arith.constant 8 : index
    %7 = vector.load %arg9[%c0_11, %c0_12, %c8] : memref<8x8x128xbf16, #tpu.memory_space<vmem>>, vector<8x8x8xbf16>
    tpu.vector_store %arg9[%c0_11, %c0_12, %c8], %6 {strides = array<i32>} : memref<8x8x128xbf16, #tpu.memory_space<vmem>>, vector<8x8x8xbf16>,
    %c0_13 = arith.constant 0 : index
    %c0_14 = arith.constant 0 : index
    %c1_15 = arith.constant 1 : index
    %c0_16 = arith.constant 0 : index
    %8 = vector.load %arg1[%c0_13, %c0_14, %c1_15, %c0_16] : memref<4x9x9x8xbf16, #tpu.memory_space<vmem>>, vector<1x8x8x8xbf16>
    %9 = vector.shape_cast %8 : vector<1x8x8x8xbf16> to vector<8x8x8xbf16>
    %c0_17 = arith.constant 0 : index
    %c0_18 = arith.constant 0 : index
    %c16 = arith.constant 16 : index
    %10 = vector.load %arg9[%c0_17, %c0_18, %c16] : memref<8x8x128xbf16, #tpu.memory_space<vmem>>, vector<8x8x8xbf16>
    tpu.vector_store %arg9[%c0_17, %c0_18, %c16], %9 {strides = array<i32>} : memref<8x8x128xbf16, #tpu.memory_space<vmem>>, vector<8x8x8xbf16>,
    %c2 = arith.constant 2 : index
    %c0_19 = arith.constant 0 : index
    %c0_20 = arith.constant 0 : index
    %c0_21 = arith.constant 0 : index
    %11 = vector.load %arg1[%c2, %c0_19, %c0_20, %c0_21] : memref<4x9x9x8xbf16, #tpu.memory_space<vmem>>, vector<1x8x8x8xbf16>
    %12 = vector.shape_cast %11 : vector<1x8x8x8xbf16> to vector<8x8x8xbf16>
    %c0_22 = arith.constant 0 : index
    %c0_23 = arith.constant 0 : index
    %c24 = arith.constant 24 : index
    %13 = vector.load %arg9[%c0_22, %c0_23, %c24] : memref<8x8x128xbf16, #tpu.memory_space<vmem>>, vector<8x8x8xbf16>
    tpu.vector_store %arg9[%c0_22, %c0_23, %c24], %12 {strides = array<i32>} : memref<8x8x128xbf16, #tpu.memory_space<vmem>>, vector<8x8x8xbf16>,
    %c3 = arith.constant 3 : index
    %c0_24 = arith.constant 0 : index
    %c0_25 = arith.constant 0 : index
    %c0_26 = arith.constant 0 : index
    %14 = vector.load %arg1[%c3, %c0_24, %c0_25, %c0_26] : memref<4x9x9x8xbf16, #tpu.memory_space<vmem>>, vector<1x8x8x8xbf16>
    %15 = vector.shape_cast %14 : vector<1x8x8x8xbf16> to vector<8x8x8xbf16>
    %c0_27 = arith.constant 0 : index
    %c0_28 = arith.constant 0 : index
    %c32 = arith.constant 32 : index
    %16 = vector.load %arg9[%c0_27, %c0_28, %c32] : memref<8x8x128xbf16, #tpu.memory_space<vmem>>, vector<8x8x8xbf16>
    tpu.vector_store %arg9[%c0_27, %c0_28, %c32], %15 {strides = array<i32>} : memref<8x8x128xbf16, #tpu.memory_space<vmem>>, vector<8x8x8xbf16>,
    %c2_29 = arith.constant 2 : index
    %c0_30 = arith.constant 0 : index
    %c1_31 = arith.constant 1 : index
    %c0_32 = arith.constant 0 : index
    %17 = vector.load %arg1[%c2_29, %c0_30, %c1_31, %c0_32] : memref<4x9x9x8xbf16, #tpu.memory_space<vmem>>, vector<1x8x8x8xbf16>
    %18 = vector.shape_cast %17 : vector<1x8x8x8xbf16> to vector<8x8x8xbf16>
    %c0_33 = arith.constant 0 : index
    %c0_34 = arith.constant 0 : index
    %c40 = arith.constant 40 : index
    %19 = vector.load %arg9[%c0_33, %c0_34, %c40] : memref<8x8x128xbf16, #tpu.memory_space<vmem>>, vector<8x8x8xbf16>
    tpu.vector_store %arg9[%c0_33, %c0_34, %c40], %18 {strides = array<i32>} : memref<8x8x128xbf16, #tpu.memory_space<vmem>>, vector<8x8x8xbf16>,
    %c0_35 = arith.constant 0 : index
    %c1_36 = arith.constant 1 : index
    %c0_37 = arith.constant 0 : index
    %c0_38 = arith.constant 0 : index
    %20 = vector.load %arg1[%c0_35, %c1_36, %c0_37, %c0_38] : memref<4x9x9x8xbf16, #tpu.memory_space<vmem>>, vector<1x8x8x8xbf16>
    %21 = vector.shape_cast %20 : vector<1x8x8x8xbf16> to vector<8x8x8xbf16>
    %c0_39 = arith.constant 0 : index
    %c0_40 = arith.constant 0 : index
    %c48 = arith.constant 48 : index
    %22 = vector.load %arg9[%c0_39, %c0_40, %c48] : memref<8x8x128xbf16, #tpu.memory_space<vmem>>, vector<8x8x8xbf16>
    tpu.vector_store %arg9[%c0_39, %c0_40, %c48], %21 {strides = array<i32>} : memref<8x8x128xbf16, #tpu.memory_space<vmem>>, vector<8x8x8xbf16>,
    %c1_41 = arith.constant 1 : index
    %c1_42 = arith.constant 1 : index
    %c0_43 = arith.constant 0 : index
    %c0_44 = arith.constant 0 : index
    %23 = vector.load %arg1[%c1_41, %c1_42, %c0_43, %c0_44] : memref<4x9x9x8xbf16, #tpu.memory_space<vmem>>, vector<1x8x8x8xbf16>
    %24 = vector.shape_cast %23 : vector<1x8x8x8xbf16> to vector<8x8x8xbf16>
    %c0_45 = arith.constant 0 : index
    %c0_46 = arith.constant 0 : index
    %c56 = arith.constant 56 : index
    %25 = vector.load %arg9[%c0_45, %c0_46, %c56] : memref<8x8x128xbf16, #tpu.memory_space<vmem>>, vector<8x8x8xbf16>
    tpu.vector_store %arg9[%c0_45, %c0_46, %c56], %24 {strides = array<i32>} : memref<8x8x128xbf16, #tpu.memory_space<vmem>>, vector<8x8x8xbf16>,
    %c0_47 = arith.constant 0 : index
    %c1_48 = arith.constant 1 : index
    %c1_49 = arith.constant 1 : index
    %c0_50 = arith.constant 0 : index
    %26 = vector.load %arg1[%c0_47, %c1_48, %c1_49, %c0_50] : memref<4x9x9x8xbf16, #tpu.memory_space<vmem>>, vector<1x8x8x8xbf16>
    %27 = vector.shape_cast %26 : vector<1x8x8x8xbf16> to vector<8x8x8xbf16>
    %c0_51 = arith.constant 0 : index
    %c0_52 = arith.constant 0 : index
    %c64 = arith.constant 64 : index
    %28 = vector.load %arg9[%c0_51, %c0_52, %c64] : memref<8x8x128xbf16, #tpu.memory_space<vmem>>, vector<8x8x8xbf16>
    tpu.vector_store %arg9[%c0_51, %c0_52, %c64], %27 {strides = array<i32>} : memref<8x8x128xbf16, #tpu.memory_space<vmem>>, vector<8x8x8xbf16>,
    %c0_53 = arith.constant 0 : index
    %c0_54 = arith.constant 0 : index
    %c0_55 = arith.constant 0 : index
    %29 = vector.load %arg9[%c0_53, %c0_54, %c0_55] : memref<8x8x128xbf16, #tpu.memory_space<vmem>>, vector<8x8x128xbf16>
    %30 = vector.shape_cast %29 : vector<8x8x128xbf16> to vector<64x128xbf16>
    %c0_56 = arith.constant 0 : index
    %c0_57 = arith.constant 0 : index
    %31 = vector.load %arg2[%c0_56, %c0_57] : memref<128x256xbf16, #tpu.memory_space<vmem>>, vector<128x256xbf16>
    %cst_58 = arith.constant dense<0.000000e+00> : vector<64x256xf32>
    %32 = tpu.matmul %30, %31, %cst_58 {dimension_numbers = #tpu.dot_dimension_numbers<[1], [0], [0], [1], [0, 0, 1, 1], [], []>} : vector<64x128xbf16>, vector<128x256xbf16>, vector<64x256xf32> -> vector<64x256xf32>
    %33 = vector.extract_strided_slice %32 {offsets = [0, 0], sizes = [64, 128], strides = [1, 1]} : vector<64x256xf32> to vector<64x128xf32>
    %34 = arith.truncf %33 : vector<64x128xf32> to vector<64x128xbf16>
    %c0_59 = arith.constant 0 : index
    %c0_60 = arith.constant 0 : index
    %c0_61 = arith.constant 0 : index
    %35 = vector.load %arg3[%c0_59, %c0_60, %c0_61] : memref<1x64x128xbf16, #tpu.memory_space<vmem>>, vector<1x64x128xbf16>
    %36 = vector.shape_cast %35 : vector<1x64x128xbf16> to vector<64x128xbf16>
    %37 = vector.shape_cast %34 : vector<64x128xbf16> to vector<1x64x128xbf16>
    tpu.vector_store %arg3[%c0_59, %c0_60, %c0_61], %37 {strides = array<i32>} : memref<1x64x128xbf16, #tpu.memory_space<vmem>>, vector<1x64x128xbf16>,
    %cst_62 = arith.constant dense<0.000000e+00> : vector<128xf32>
    %38 = vector.multi_reduction <add>, %33, %cst_62 [0] : vector<64x128xf32> to vector<128xf32>
    %39 = vector.shape_cast %38 : vector<128xf32> to vector<1x128xf32>
    %c0_63 = arith.constant 0 : index
    %c0_64 = arith.constant 0 : index
    %c0_65 = arith.constant 0 : index
    %40 = vector.load %arg5[%c0_63, %c0_64, %c0_65] : memref<1x1x128xf32, #tpu.memory_space<vmem>>, vector<1x1x128xf32>
    %41 = vector.shape_cast %40 : vector<1x1x128xf32> to vector<1x128xf32>
    %42 = vector.shape_cast %39 : vector<1x128xf32> to vector<1x1x128xf32>
    tpu.vector_store %arg5[%c0_63, %c0_64, %c0_65], %42 {strides = array<i32>} : memref<1x1x128xf32, #tpu.memory_space<vmem>>, vector<1x1x128xf32>,
    %43 = arith.mulf %33, %33 : vector<64x128xf32>
    %cst_66 = arith.constant dense<0.000000e+00> : vector<128xf32>
    %44 = vector.multi_reduction <add>, %43, %cst_66 [0] : vector<64x128xf32> to vector<128xf32>
    %45 = vector.shape_cast %44 : vector<128xf32> to vector<1x128xf32>
    %c0_67 = arith.constant 0 : index
    %c0_68 = arith.constant 0 : index
    %c0_69 = arith.constant 0 : index
    %46 = vector.load %arg6[%c0_67, %c0_68, %c0_69] : memref<1x1x128xf32, #tpu.memory_space<vmem>>, vector<1x1x128xf32>
    %47 = vector.shape_cast %46 : vector<1x1x128xf32> to vector<1x128xf32>
    %48 = vector.shape_cast %45 : vector<1x128xf32> to vector<1x1x128xf32>
    tpu.vector_store %arg6[%c0_67, %c0_68, %c0_69], %48 {strides = array<i32>} : memref<1x1x128xf32, #tpu.memory_space<vmem>>, vector<1x1x128xf32>,
    %49 = vector.extract_strided_slice %32 {offsets = [0, 128], sizes = [64, 128], strides = [1, 1]} : vector<64x256xf32> to vector<64x128xf32>
    %50 = arith.truncf %49 : vector<64x128xf32> to vector<64x128xbf16>
    %c0_70 = arith.constant 0 : index
    %c0_71 = arith.constant 0 : index
    %c0_72 = arith.constant 0 : index
    %51 = vector.load %arg4[%c0_70, %c0_71, %c0_72] : memref<1x64x128xbf16, #tpu.memory_space<vmem>>, vector<1x64x128xbf16>
    %52 = vector.shape_cast %51 : vector<1x64x128xbf16> to vector<64x128xbf16>
    %53 = vector.shape_cast %50 : vector<64x128xbf16> to vector<1x64x128xbf16>
    tpu.vector_store %arg4[%c0_70, %c0_71, %c0_72], %53 {strides = array<i32>} : memref<1x64x128xbf16, #tpu.memory_space<vmem>>, vector<1x64x128xbf16>,
    %cst_73 = arith.constant dense<0.000000e+00> : vector<128xf32>
    %54 = vector.multi_reduction <add>, %49, %cst_73 [0] : vector<64x128xf32> to vector<128xf32>
    %55 = vector.shape_cast %54 : vector<128xf32> to vector<1x128xf32>
    %c0_74 = arith.constant 0 : index
    %c0_75 = arith.constant 0 : index
    %c0_76 = arith.constant 0 : index
    %56 = vector.load %arg7[%c0_74, %c0_75, %c0_76] : memref<1x1x128xf32, #tpu.memory_space<vmem>>, vector<1x1x128xf32>
    %57 = vector.shape_cast %56 : vector<1x1x128xf32> to vector<1x128xf32>
    %58 = vector.shape_cast %55 : vector<1x128xf32> to vector<1x1x128xf32>
    tpu.vector_store %arg7[%c0_74, %c0_75, %c0_76], %58 {strides = array<i32>} : memref<1x1x128xf32, #tpu.memory_space<vmem>>, vector<1x1x128xf32>,
    %59 = arith.mulf %49, %49 : vector<64x128xf32>
    %cst_77 = arith.constant dense<0.000000e+00> : vector<128xf32>
    %60 = vector.multi_reduction <add>, %59, %cst_77 [0] : vector<64x128xf32> to vector<128xf32>
    %61 = vector.shape_cast %60 : vector<128xf32> to vector<1x128xf32>
    %c0_78 = arith.constant 0 : index
    %c0_79 = arith.constant 0 : index
    %c0_80 = arith.constant 0 : index
    %62 = vector.load %arg8[%c0_78, %c0_79, %c0_80] : memref<1x1x128xf32, #tpu.memory_space<vmem>>, vector<1x1x128xf32>
    %63 = vector.shape_cast %62 : vector<1x1x128xf32> to vector<1x128xf32>
    %64 = vector.shape_cast %61 : vector<1x128xf32> to vector<1x1x128xf32>
    tpu.vector_store %arg8[%c0_78, %c0_79, %c0_80], %64 {strides = array<i32>} : memref<1x1x128xf32, #tpu.memory_space<vmem>>, vector<1x1x128xf32>,
    return
  }
  func.func @transform_0(%arg0: i32) -> (i32, i32, i32, i32) {
    %c0_i32 = arith.constant 0 : i32
    %c0_i32_0 = arith.constant 0 : i32
    %c0_i32_1 = arith.constant 0 : i32
    %c0_i32_2 = arith.constant 0 : i32
    return %arg0, %c0_i32, %c0_i32_0, %c0_i32_1 : i32, i32, i32, i32
  }
  func.func @transform_1(%arg0: i32) -> (i32, i32) {
    %c0_i32 = arith.constant 0 : i32
    %c0_i32_0 = arith.constant 0 : i32
    %c0_i32_1 = arith.constant 0 : i32
    return %c0_i32, %c0_i32_0 : i32, i32
  }
  func.func @transform_2(%arg0: i32) -> (i32, i32, i32) {
    %c0_i32 = arith.constant 0 : i32
    %c0_i32_0 = arith.constant 0 : i32
    %c0_i32_1 = arith.constant 0 : i32
    return %arg0, %c0_i32, %c0_i32_0 : i32, i32, i32
  }
  func.func @transform_3(%arg0: i32) -> (i32, i32, i32) {
    %c0_i32 = arith.constant 0 : i32
    %c0_i32_0 = arith.constant 0 : i32
    %c0_i32_1 = arith.constant 0 : i32
    return %arg0, %c0_i32, %c0_i32_0 : i32, i32, i32
  }
  func.func @transform_4(%arg0: i32) -> (i32, i32, i32) {
    %c0_i32 = arith.constant 0 : i32
    %c0_i32_0 = arith.constant 0 : i32
    %c0_i32_1 = arith.constant 0 : i32
    return %arg0, %c0_i32, %c0_i32_0 : i32, i32, i32
  }
  func.func @transform_5(%arg0: i32) -> (i32, i32, i32) {
    %c0_i32 = arith.constant 0 : i32
    %c0_i32_0 = arith.constant 0 : i32
    %c0_i32_1 = arith.constant 0 : i32
    return %arg0, %c0_i32, %c0_i32_0 : i32, i32, i32
  }
  func.func @transform_6(%arg0: i32) -> (i32, i32, i32) {
    %c0_i32 = arith.constant 0 : i32
    %c0_i32_0 = arith.constant 0 : i32
    %c0_i32_1 = arith.constant 0 : i32
    return %arg0, %c0_i32, %c0_i32_0 : i32, i32, i32
  }
  func.func @transform_7(%arg0: i32) -> (i32, i32, i32) {
    %c0_i32 = arith.constant 0 : i32
    %c0_i32_0 = arith.constant 0 : i32
    %c0_i32_1 = arith.constant 0 : i32
    return %arg0, %c0_i32, %c0_i32_0 : i32, i32, i32
  }
}

</mosaic_0001>

<llo_original>
// kernel: tpu_custom_call.1
$region0: #{tpu_custom_call.1}
  #allocation0 [shape = 'u32[]', space=smem, size = 0x4, offset = 0x4, fixed_abs, tag = 'smem constant byte address 0x4 - core index']
  #allocation1 [shape = 'u32[144,128]{1,0:T(1,128)}', space=vmem, size = 0x12000, scoped, tag = 'internal scratch']
  #allocation2 [shape = 'bf16[8,8,128]{2,1,0:T(8,128)(2,1)}', space=vmem, size = 0x4000, scoped, tag = 'scratch operand']
  %s0 = inlined_call_operand.vmem [shape: bf16[8,9,9,8], index: 0, kind: input, shape index: {}]
  %s1 = inlined_call_operand.vmem [shape: bf16[128,256], index: 1, kind: input, shape index: {}]
  %s2 = inlined_call_operand.hbm [shape: bf16[2,64,128], index: 2, kind: output, shape index: {0}]
  %s3 = inlined_call_operand.hbm [shape: bf16[2,64,128], index: 3, kind: output, shape index: {1}]
  %s4 = inlined_call_operand.hbm [shape: f32[2,1,128], index: 4, kind: output, shape index: {2}]
  %s5 = inlined_call_operand.hbm [shape: f32[2,1,128], index: 5, kind: output, shape index: {3}]
  %s6 = inlined_call_operand.hbm [shape: f32[2,1,128], index: 6, kind: output, shape index: {4}]
  %s7 = inlined_call_operand.hbm [shape: f32[2,1,128], index: 7, kind: output, shape index: {5}]
  %8 = xla_tuple %s2, %s3, %s4, %s5, %s6, %s7
  %s9 = sld [smem:[#allocation0]]
  $region81: #{tpu_custom_call.1} parent=0
    _
  %s11 = ssub.s32 1, %s9
  %s12 = scalar_select 0, %s11, %s9
  $region1: #{tpu_custom_call.1} parent=0
    #allocation3 [shape = 'u8[32768]{0}', space=vmem, size = 0x8000, scoped, tag = 'output window, operand 0']
    #allocation4 [shape = 's32[2]{0}', space=sflag, size = 0x8, scoped, tag = 'scoped memory for tpu_custom_call.1']
    #allocation5 [shape = 'u8[32768]{0}', space=vmem, size = 0x8000, scoped, tag = 'output window, operand 1']
    #allocation6 [shape = 's32[2]{0}', space=sflag, size = 0x8, scoped, tag = 'scoped memory for tpu_custom_call.1']
    #allocation7 [shape = 'u8[1024]{0}', space=vmem, size = 0x400, scoped, tag = 'output window, operand 2']
    #allocation8 [shape = 'u8[1024]{0}', space=vmem, size = 0x400, scoped, tag = 'output window, operand 3']
    #allocation9 [shape = 's32[2]{0}', space=sflag, size = 0x8, scoped, tag = 'scoped memory for tpu_custom_call.1']
    #allocation10 [shape = 'u8[1024]{0}', space=vmem, size = 0x400, scoped, tag = 'output window, operand 4']
    #allocation11 [shape = 'u8[1024]{0}', space=vmem, size = 0x400, scoped, tag = 'output window, operand 5']
    #allocation12 [shape = 's32[2]{0}', space=sflag, size = 0x8, scoped, tag = 'scoped memory for tpu_custom_call.1']
    %13 = vsyncpa [#allocation4], 0
    %s14 = scalar_lea.sflag [#allocation4], 1
    %15 = vsyncpa %s14, 0
    %16 = vsyncpa [#allocation6], 0
    %s17 = scalar_lea.sflag [#allocation6], 1
    %18 = vsyncpa %s17, 0
    %19 = vsyncpa [#allocation9], 0
    %s20 = scalar_lea.sflag [#allocation9], 1
    %21 = vsyncpa %s20, 0
    %22 = vsyncpa [#allocation12], 0
    %s23 = scalar_lea.sflag [#allocation12], 1
    %24 = vsyncpa %s23, 0
    loop: start=0, step=1, limit=4
    $region2: #{tpu_custom_call.1} parent=1 // loop_pre_header
      _
    $region3: #{tpu_custom_call.1} parent=1 // loop_header
      %s26 = sphi 0, %s30
      %p27 = scmp.ge.s32.totalorder %s26, 4
      %s36 = sphi 0, %s38
      %s39 = sphi 0, %s36
      %s40 = sphi 0, %s39
      %s56 = sphi 0, %s40
      %s60 = sphi 0, %s60
      %s62 = sphi 0, %s60
      %s63 = sphi 0, %s62
      %s77 = sphi 0, %s63
      %s83 = sphi 0, %s85
      %s86 = sphi 0, %s83
      %s87 = sphi 0, %s86
      %s103 = sphi 0, %s87
      %s109 = sphi 0, %s111
      %s112 = sphi 0, %s109
      %s113 = sphi 0, %s112
      %s129 = sphi 0, %s113
      %s135 = sphi 0, %s137
      %s138 = sphi 0, %s135
      %s139 = sphi 0, %s138
      %s155 = sphi 0, %s139
      %s161 = sphi 0, %s163
      %s164 = sphi 0, %s161
      %s165 = sphi 0, %s164
      %s181 = sphi 0, %s165
      %s187 = sphi 0, %s189
      %s190 = sphi 0, %s187
      %s191 = sphi 0, %s190
      %s207 = sphi 0, %s191
      %s213 = sphi 0, %s215
      %s216 = sphi 0, %s213
      %s217 = sphi 0, %s216
      %s233 = sphi 0, %s217
    $region4: #{tpu_custom_call.1} parent=1 // loop_header_branch
      %29 = sbr.rel (%p27) target = $region8
    $region5: #{tpu_custom_call.1} parent=1 // loop_body
      %s31 = ssub.s32 %s26, 1
      %s32 = ssub.s32 %s26, 2
      %s33 = sadd.s32 %s26, 1
      %s34 = ssub.s32 %s26, %s33
      %p35 = scmp.eq.s32.totalorder %s34, 0
      %s37 = sadd.s32 %s36, 1
      %s38 = scalar_select %p35, %s36, %s37
      %p41 = pneg %p35
      %p42 = scmp.eq.s32.totalorder %s26, 1
      %p43 = por %p41, %p42
      %p44 = scmp.ne.s32.totalorder %s36, %s39
      %p45 = scmp.eq.s32.totalorder %s26, 0
      %p46 = por %p44, %p45
      %p47 = scmp.ne.s32.totalorder %s36, %s39
      %p48 = scmp.eq.s32.totalorder %s31, 1
      %p49 = por %p47, %p48
      %p50 = scmp.ne.s32.totalorder %s39, %s40
      %p51 = scmp.eq.s32.totalorder %s31, 0
      %p52 = por %p50, %p51
      %p53 = scmp.ne.s32.totalorder %s39, %s40
      %p54 = scmp.eq.s32.totalorder %s32, 1
      %p55 = por %p53, %p54
      %p57 = scmp.ne.s32.totalorder %s40, %s56
      %p58 = scmp.eq.s32.totalorder %s32, 0
      %p59 = por %p57, %p58
      %s61 = sadd.s32 %s60, 1
      %p64 = scmp.eq.s32.totalorder %s26, 1
      %p65 = scmp.ne.s32.totalorder %s60, %s62
      %p66 = scmp.eq.s32.totalorder %s26, 0
      %p67 = por %p65, %p66
      %p68 = scmp.ne.s32.totalorder %s60, %s62
      %p69 = scmp.eq.s32.totalorder %s31, 1
      %p70 = por %p68, %p69
      %p71 = scmp.ne.s32.totalorder %s62, %s63
      %p72 = scmp.eq.s32.totalorder %s31, 0
      %p73 = por %p71, %p72
      %p74 = scmp.ne.s32.totalorder %s62, %s63
      %p75 = scmp.eq.s32.totalorder %s32, 1
      %p76 = por %p74, %p75
      %p78 = scmp.ne.s32.totalorder %s63, %s77
      %p79 = scmp.eq.s32.totalorder %s32, 0
      %p80 = por %p78, %p79
      %s81 = ssub.s32 %s26, %s33
      %p82 = scmp.eq.s32.totalorder %s81, 0
      %s84 = sadd.s32 %s83, 1
      %s85 = scalar_select %p82, %s83, %s84
      %p88 = pneg %p82
      %p89 = scmp.eq.s32.totalorder %s26, 1
      %p90 = por %p88, %p89
      %p91 = scmp.ne.s32.totalorder %s83, %s86
      %p92 = scmp.eq.s32.totalorder %s26, 0
      %p93 = por %p91, %p92
      %p94 = scmp.ne.s32.totalorder %s83, %s86
      %p95 = scmp.eq.s32.totalorder %s31, 1
      %p96 = por %p94, %p95
      %p97 = scmp.ne.s32.totalorder %s86, %s87
      %p98 = scmp.eq.s32.totalorder %s31, 0
      %p99 = por %p97, %p98
      %p100 = scmp.ne.s32.totalorder %s86, %s87
      %p101 = scmp.eq.s32.totalorder %s32, 1
      %p102 = por %p100, %p101
      %p104 = scmp.ne.s32.totalorder %s87, %s103
      %p105 = scmp.eq.s32.totalorder %s32, 0
      %p106 = por %p104, %p105
      %s107 = ssub.s32 %s26, %s33
      %p108 = scmp.eq.s32.totalorder %s107, 0
      %s110 = sadd.s32 %s109, 1
      %s111 = scalar_select %p108, %s109, %s110
      %p114 = pneg %p108
      %p115 = scmp.eq.s32.totalorder %s26, 1
      %p116 = por %p114, %p115
      %p117 = scmp.ne.s32.totalorder %s109, %s112
      %p118 = scmp.eq.s32.totalorder %s26, 0
      %p119 = por %p117, %p118
      %p120 = scmp.ne.s32.totalorder %s109, %s112
      %p121 = scmp.eq.s32.totalorder %s31, 1
      %p122 = por %p120, %p121
      %p123 = scmp.ne.s32.totalorder %s112, %s113
      %p124 = scmp.eq.s32.totalorder %s31, 0
      %p125 = por %p123, %p124
      %p126 = scmp.ne.s32.totalorder %s112, %s113
      %p127 = scmp.eq.s32.totalorder %s32, 1
      %p128 = por %p126, %p127
      %p130 = scmp.ne.s32.totalorder %s113, %s129
      %p131 = scmp.eq.s32.totalorder %s32, 0
      %p132 = por %p130, %p131
      %s133 = ssub.s32 %s26, %s33
      %p134 = scmp.eq.s32.totalorder %s133, 0
      %s136 = sadd.s32 %s135, 1
      %s137 = scalar_select %p134, %s135, %s136
      %p140 = pneg %p134
      %p141 = scmp.eq.s32.totalorder %s26, 1
      %p142 = por %p140, %p141
      %p143 = scmp.ne.s32.totalorder %s135, %s138
      %p144 = scmp.eq.s32.totalorder %s26, 0
      %p145 = por %p143, %p144
      %p146 = scmp.ne.s32.totalorder %s135, %s138
      %p147 = scmp.eq.s32.totalorder %s31, 1
      %p148 = por %p146, %p147
      %p149 = scmp.ne.s32.totalorder %s138, %s139
      %p150 = scmp.eq.s32.totalorder %s31, 0
      %p151 = por %p149, %p150
      %p152 = scmp.ne.s32.totalorder %s138, %s139
      %p153 = scmp.eq.s32.totalorder %s32, 1
      %p154 = por %p152, %p153
      %p156 = scmp.ne.s32.totalorder %s139, %s155
      %p157 = scmp.eq.s32.totalorder %s32, 0
      %p158 = por %p156, %p157
      %s159 = ssub.s32 %s26, %s33
      %p160 = scmp.eq.s32.totalorder %s159, 0
      %s162 = sadd.s32 %s161, 1
      %s163 = scalar_select %p160, %s161, %s162
      %p166 = pneg %p160
      %p167 = scmp.eq.s32.totalorder %s26, 1
      %p168 = por %p166, %p167
      %p169 = scmp.ne.s32.totalorder %s161, %s164
      %p170 = scmp.eq.s32.totalorder %s26, 0
      %p171 = por %p169, %p170
      %p172 = scmp.ne.s32.totalorder %s161, %s164
      %p173 = scmp.eq.s32.totalorder %s31, 1
      %p174 = por %p172, %p173
      %p175 = scmp.ne.s32.totalorder %s164, %s165
      %p176 = scmp.eq.s32.totalorder %s31, 0
      %p177 = por %p175, %p176
      %p178 = scmp.ne.s32.totalorder %s164, %s165
      %p179 = scmp.eq.s32.totalorder %s32, 1
      %p180 = por %p178, %p179
      %p182 = scmp.ne.s32.totalorder %s165, %s181
      %p183 = scmp.eq.s32.totalorder %s32, 0
      %p184 = por %p182, %p183
      %s185 = ssub.s32 %s26, %s33
      %p186 = scmp.eq.s32.totalorder %s185, 0
      %s188 = sadd.s32 %s187, 1
      %s189 = scalar_select %p186, %s187, %s188
      %p192 = pneg %p186
      %p193 = scmp.eq.s32.totalorder %s26, 1
      %p194 = por %p192, %p193
      %p195 = scmp.ne.s32.totalorder %s187, %s190
      %p196 = scmp.eq.s32.totalorder %s26, 0
      %p197 = por %p195, %p196
      %p198 = scmp.ne.s32.totalorder %s187, %s190
      %p199 = scmp.eq.s32.totalorder %s31, 1
      %p200 = por %p198, %p199
      %p201 = scmp.ne.s32.totalorder %s190, %s191
      %p202 = scmp.eq.s32.totalorder %s31, 0
      %p203 = por %p201, %p202
      %p204 = scmp.ne.s32.totalorder %s190, %s191
      %p205 = scmp.eq.s32.totalorder %s32, 1
      %p206 = por %p204, %p205
      %p208 = scmp.ne.s32.totalorder %s191, %s207
      %p209 = scmp.eq.s32.totalorder %s32, 0
      %p210 = por %p208, %p209
      %s211 = ssub.s32 %s26, %s33
      %p212 = scmp.eq.s32.totalorder %s211, 0
      %s214 = sadd.s32 %s213, 1
      %s215 = scalar_select %p212, %s213, %s214
      %p218 = pneg %p212
      %p219 = scmp.eq.s32.totalorder %s26, 1
      %p220 = por %p218, %p219
      %p221 = scmp.ne.s32.totalorder %s213, %s216
      %p222 = scmp.eq.s32.totalorder %s26, 0
      %p223 = por %p221, %p222
      %p224 = scmp.ne.s32.totalorder %s213, %s216
      %p225 = scmp.eq.s32.totalorder %s31, 1
      %p226 = por %p224, %p225
      %p227 = scmp.ne.s32.totalorder %s216, %s217
      %p228 = scmp.eq.s32.totalorder %s31, 0
      %p229 = por %p227, %p228
      %p230 = scmp.ne.s32.totalorder %s216, %s217
      %p231 = scmp.eq.s32.totalorder %s32, 1
      %p232 = por %p230, %p231
      %p234 = scmp.ne.s32.totalorder %s217, %s233
      %p235 = scmp.eq.s32.totalorder %s32, 0
      %p236 = por %p234, %p235
      %p237 = scmp.le.s32.totalorder 1, %s26
      %p238 = scmp.lt.s32.totalorder %s26, 3
      %p239 = pnand %p237, %p238
      %p240 = pneg %p239
      // Predicated region
      $region9: #{tpu_custom_call.1} parent=5 // pred_check
        _
      $region10: #{tpu_custom_call.1} parent=5 // pred_check_branch
        %242 = sbr.rel (%p239) target = $region12
      $region11: #{tpu_custom_call.1} parent=5 // pred_region
        %s243 = ssub.s32 %s26, 1
        // Predicated region
        $region13: #{tpu_custom_call.1} parent=11 // pred_check
          %p244 = pneg %p73
        $region14: #{tpu_custom_call.1} parent=11 // pred_check_branch
          %246 = sbr.rel (%p244) target = $region16
        $region15: #{tpu_custom_call.1} parent=11 // pred_region
          _
        $region16: #{tpu_custom_call.1} parent=11 // pred_fallthru
          _
      $region12: #{tpu_custom_call.1} parent=5 // pred_fallthru
        _
      %p247 = scmp.lt.s32.totalorder %s26, 2
      // Predicated region
      $region17: #{tpu_custom_call.1} parent=5 // pred_check
        %p248 = pneg %p247
      $region18: #{tpu_custom_call.1} parent=5 // pred_check_branch
        %250 = sbr.rel (%p248) target = $region20
      $region19: #{tpu_custom_call.1} parent=5 // pred_region
        // Predicated region
        $region21: #{tpu_custom_call.1} parent=19 // pred_check
          %p251 = pneg %p46
        $region22: #{tpu_custom_call.1} parent=19 // pred_check_branch
          %253 = sbr.rel (%p251) target = $region24
        $region23: #{tpu_custom_call.1} parent=19 // pred_region
          %s254 = smul.u32 4, %s26
          %p255 = scmp.lt.s32.totalorder %s254, 7
          %s256 = scalar_select %p255, %s254, 7
          %s257 = smul.addr %s256, 18
          %s258 = smul.addr %s257, 4
          %s259 = scalar_lea.vmem %s0, %s258
          %s260 = smul.u32 4, %s26
        $region24: #{tpu_custom_call.1} parent=19 // pred_fallthru
          _
      $region20: #{tpu_custom_call.1} parent=5 // pred_fallthru
        _
      %p261 = scmp.le.s32.totalorder 1, %s26
      %p262 = scmp.lt.s32.totalorder %s26, 3
      %p263 = pnand %p261, %p262
      %p264 = pneg %p263
      // Predicated region
      $region25: #{tpu_custom_call.1} parent=5 // pred_check
        _
      $region26: #{tpu_custom_call.1} parent=5 // pred_check_branch
        %266 = sbr.rel (%p263) target = $region28
      $region27: #{tpu_custom_call.1} parent=5 // pred_region
        %s267 = ssub.s32 %s26, 1
        %s268 = smul.u32 4, %s31
        %p269 = scmp.lt.s32.totalorder %s268, 7
        %s270 = scalar_select %p269, %s268, 7
        %s271 = smul.addr %s270, 18
        %s272 = smul.addr %s271, 4
        %s273 = scalar_lea.vmem %s0, %s272
        %p274 = pneg %p52
        %p275 = pneg %p49
        %p276 = pneg %p73
        %p277 = pneg %p70
        %p278 = pneg %p99
        %p279 = pneg %p96
        %s280 = sand.u32 %s86, 1
        %s281 = scalar_lea.sflag [#allocation4], %s280
        %s282 = sand.u32 %s86, 1
        %s283 = smul.addr %s282, 32
        %s284 = scalar_lea.vmem [#allocation3], %s283
        %p285 = pneg %p125
        %p286 = pneg %p122
        %s287 = sand.u32 %s31, 1
        %s288 = scalar_lea.sflag [#allocation6], %s287
        %s289 = sand.u32 %s112, 1
        %s290 = smul.addr %s289, 32
        %s291 = scalar_lea.vmem [#allocation5], %s290
        %p292 = pneg %p151
        %p293 = pneg %p148
        %s294 = sand.u32 %s31, 1
        %s295 = scalar_lea.sflag [#allocation6], %s294
        %s296 = sand.u32 %s138, 1
        %s297 = scalar_lea.vmem [#allocation7], %s296
        %p298 = pneg %p177
        %p299 = pneg %p174
        %s300 = sand.u32 %s31, 1
        %s301 = scalar_lea.sflag [#allocation9], %s300
        %s302 = sand.u32 %s164, 1
        %s303 = scalar_lea.vmem [#allocation8], %s302
        %p304 = pneg %p203
        %p305 = pneg %p200
        %s306 = sand.u32 %s31, 1
        %s307 = scalar_lea.sflag [#allocation9], %s306
        %s308 = sand.u32 %s190, 1
        %s309 = scalar_lea.vmem [#allocation10], %s308
        %p310 = pneg %p229
        %p311 = pneg %p226
        %s312 = sand.u32 %s216, 1
        %s313 = scalar_lea.sflag [#allocation12], %s312
        %s314 = sand.u32 %s216, 1
        %s315 = scalar_lea.vmem [#allocation11], %s314
        %s316 = smul.u32 4, %s31
        %p317 = scmp.lt.s32.totalorder %s316, 7
        %s318 = scalar_select %p317, %s316, 7
        %s319 = smul.addr %s318, 18
        %s320 = smul.addr %s319, 4
        %s321 = scalar_lea.vmem %s0, %s320
        %s322 = smul.u32 4, %s31
        %vm324 = vcmask 1044032
        %325 = vst.msk [vmem:[#allocation2] sm:$0xf] %vm324, 0
        %326 = vst.msk [vmem:[#allocation2 + $0x4] sm:$0xf] %vm324, 0
        %327 = vst.msk [vmem:[#allocation2 + $0x8] sm:$0xf] %vm324, 0
        %328 = vst.msk [vmem:[#allocation2 + $0xc] sm:$0xf] %vm324, 0
        %329 = vst.msk [vmem:[#allocation2 + $0x10] sm:$0xf] %vm324, 0
        %330 = vst.msk [vmem:[#allocation2 + $0x14] sm:$0xf] %vm324, 0
        %331 = vst.msk [vmem:[#allocation2 + $0x18] sm:$0xf] %vm324, 0
        %332 = vst.msk [vmem:[#allocation2 + $0x1c] sm:$0xf] %vm324, 0
        %v333 = vld [vmem:[%s321] sm:$0xf]
        %v334 = vld [vmem:[%s321 + $0x8] sm:$0xf]
        %v335 = vld [vmem:[%s321 + $0x10] sm:$0xf]
        %v336 = vld [vmem:[%s321 + $0x18] sm:$0xf]
        %v337 = vld [vmem:[%s321 + $0x20] sm:$0xf]
        %v338 = vld [vmem:[%s321 + $0x28] sm:$0xf]
        %v339 = vld [vmem:[%s321 + $0x30] sm:$0xf]
        %v340 = vld [vmem:[%s321 + $0x38] sm:$0xf]
        %vm341 = vcmask 60416
        %342 = vst.msk [vmem:[#allocation2] sm:$0xf] %vm341, %v333
        %343 = vst.msk [vmem:[#allocation2 + $0x4] sm:$0xf] %vm341, %v334
        %344 = vst.msk [vmem:[#allocation2 + $0x8] sm:$0xf] %vm341, %v335
        %345 = vst.msk [vmem:[#allocation2 + $0xc] sm:$0xf] %vm341, %v336
        %346 = vst.msk [vmem:[#allocation2 + $0x10] sm:$0xf] %vm341, %v337
        %347 = vst.msk [vmem:[#allocation2 + $0x14] sm:$0xf] %vm341, %v338
        %348 = vst.msk [vmem:[#allocation2 + $0x18] sm:$0xf] %vm341, %v339
        %349 = vst.msk [vmem:[#allocation2 + $0x1c] sm:$0xf] %vm341, %v340
        %s350 = scalar_lea.vmem %s321, 72
        %v351 = vld [vmem:[%s350] sm:$0xf]
        %v352 = vld [vmem:[%s350 + $0x8] sm:$0xf]
        %v353 = vld [vmem:[%s350 + $0x10] sm:$0xf]
        %v354 = vld [vmem:[%s350 + $0x18] sm:$0xf]
        %v355 = vld [vmem:[%s350 + $0x20] sm:$0xf]
        %v356 = vld [vmem:[%s350 + $0x28] sm:$0xf]
        %v357 = vld [vmem:[%s350 + $0x30] sm:$0xf]
        %v358 = vld [vmem:[%s350 + $0x38] sm:$0xf]
        %367 = vrot.lane.b32.xlu0 %v351, 8
        %v368 = vpop.permute.xlu0 %367
        %369 = vrot.lane.b32.xlu0 %v352, 8
        %v370 = vpop.permute.xlu0 %369
        %371 = vrot.lane.b32.xlu0 %v353, 8
        %v372 = vpop.permute.xlu0 %371
        %373 = vrot.lane.b32.xlu0 %v354, 8
        %v374 = vpop.permute.xlu0 %373
        %375 = vrot.lane.b32.xlu0 %v355, 8
        %v376 = vpop.permute.xlu0 %375
        %377 = vrot.lane.b32.xlu0 %v356, 8
        %v378 = vpop.permute.xlu0 %377
        %379 = vrot.lane.b32.xlu0 %v357, 8
        %v380 = vpop.permute.xlu0 %379
        %381 = vrot.lane.b32.xlu0 %v358, 8
        %v382 = vpop.permute.xlu0 %381
        %vm391 = vcmask 126016
        %392 = vst.msk [vmem:[#allocation2] sm:$0xf] %vm391, %v368
        %393 = vst.msk [vmem:[#allocation2 + $0x4] sm:$0xf] %vm391, %v370
        %394 = vst.msk [vmem:[#allocation2 + $0x8] sm:$0xf] %vm391, %v372
        %395 = vst.msk [vmem:[#allocation2 + $0xc] sm:$0xf] %vm391, %v374
        %396 = vst.msk [vmem:[#allocation2 + $0x10] sm:$0xf] %vm391, %v376
        %397 = vst.msk [vmem:[#allocation2 + $0x14] sm:$0xf] %vm391, %v378
        %398 = vst.msk [vmem:[#allocation2 + $0x18] sm:$0xf] %vm391, %v380
        %399 = vst.msk [vmem:[#allocation2 + $0x1c] sm:$0xf] %vm391, %v382
        %v400 = vld [vmem:[%s321] sm:$0xf]
        %v401 = vld [vmem:[%s321 + $0x4] sm:$0x1]
        %v402 = vld [vmem:[%s321 + $0x8] sm:$0xf]
        %v403 = vld [vmem:[%s321 + $0xc] sm:$0x1]
        %v404 = vld [vmem:[%s321 + $0x10] sm:$0xf]
        %v405 = vld [vmem:[%s321 + $0x14] sm:$0x1]
        %v406 = vld [vmem:[%s321 + $0x18] sm:$0xf]
        %v407 = vld [vmem:[%s321 + $0x1c] sm:$0x1]
        %v408 = vld [vmem:[%s321 + $0x20] sm:$0xf]
        %v409 = vld [vmem:[%s321 + $0x24] sm:$0x1]
        %v410 = vld [vmem:[%s321 + $0x28] sm:$0xf]
        %v411 = vld [vmem:[%s321 + $0x2c] sm:$0x1]
        %v412 = vld [vmem:[%s321 + $0x30] sm:$0xf]
        %v413 = vld [vmem:[%s321 + $0x34] sm:$0x1]
        %v414 = vld [vmem:[%s321 + $0x38] sm:$0xf]
        %v415 = vld [vmem:[%s321 + $0x3c] sm:$0x1]
        %vm416 = vsmask.f32 3328
        %vm417 = vsmask.f32 7440
        %vm418 = vmor %vm416, %vm417
        %v420 = vshrl.u32 %v400, 16
        %v422 = vrot.slane %v420, 4
        %v423 = vshll.u32 %v400, 16
        %v425 = vrot.slane %v423, 5
        %v426 = vor.u32 %v422, %v425
        %v427 = vrot.slane %v426, 4
        %v429 = vshll.u32 %v401, 16
        %v431 = vrot.slane %v429, 5
        %v432 = vsel %vm418, %v427, %v431
        %v434 = vshrl.u32 %v402, 16
        %v436 = vrot.slane %v434, 4
        %v437 = vshll.u32 %v402, 16
        %v439 = vrot.slane %v437, 5
        %v440 = vor.u32 %v436, %v439
        %v441 = vrot.slane %v440, 4
        %v443 = vshll.u32 %v403, 16
        %v445 = vrot.slane %v443, 5
        %v446 = vsel %vm418, %v441, %v445
        %v448 = vshrl.u32 %v404, 16
        %v450 = vrot.slane %v448, 4
        %v451 = vshll.u32 %v404, 16
        %v453 = vrot.slane %v451, 5
        %v454 = vor.u32 %v450, %v453
        %v455 = vrot.slane %v454, 4
        %v457 = vshll.u32 %v405, 16
        %v459 = vrot.slane %v457, 5
        %v460 = vsel %vm418, %v455, %v459
        %v462 = vshrl.u32 %v406, 16
        %v464 = vrot.slane %v462, 4
        %v465 = vshll.u32 %v406, 16
        %v467 = vrot.slane %v465, 5
        %v468 = vor.u32 %v464, %v467
        %v469 = vrot.slane %v468, 4
        %v471 = vshll.u32 %v407, 16
        %v473 = vrot.slane %v471, 5
        %v474 = vsel %vm418, %v469, %v473
        %v476 = vshrl.u32 %v408, 16
        %v478 = vrot.slane %v476, 4
        %v479 = vshll.u32 %v408, 16
        %v481 = vrot.slane %v479, 5
        %v482 = vor.u32 %v478, %v481
        %v483 = vrot.slane %v482, 4
        %v485 = vshll.u32 %v409, 16
        %v487 = vrot.slane %v485, 5
        %v488 = vsel %vm418, %v483, %v487
        %v490 = vshrl.u32 %v410, 16
        %v492 = vrot.slane %v490, 4
        %v493 = vshll.u32 %v410, 16
        %v495 = vrot.slane %v493, 5
        %v496 = vor.u32 %v492, %v495
        %v497 = vrot.slane %v496, 4
        %v499 = vshll.u32 %v411, 16
        %v501 = vrot.slane %v499, 5
        %v502 = vsel %vm418, %v497, %v501
        %v504 = vshrl.u32 %v412, 16
        %v506 = vrot.slane %v504, 4
        %v507 = vshll.u32 %v412, 16
        %v509 = vrot.slane %v507, 5
        %v510 = vor.u32 %v506, %v509
        %v511 = vrot.slane %v510, 4
        %v513 = vshll.u32 %v413, 16
        %v515 = vrot.slane %v513, 5
        %v516 = vsel %vm418, %v511, %v515
        %v518 = vshrl.u32 %v414, 16
        %v520 = vrot.slane %v518, 4
        %v521 = vshll.u32 %v414, 16
        %v523 = vrot.slane %v521, 5
        %v524 = vor.u32 %v520, %v523
        %v525 = vrot.slane %v524, 4
        %v527 = vshll.u32 %v415, 16
        %v529 = vrot.slane %v527, 5
        %v530 = vsel %vm418, %v525, %v529
        %531 = vrot.lane.b32.xlu0 %v432, 16
        %v532 = vpop.permute.xlu0 %531
        %533 = vrot.lane.b32.xlu0 %v446, 16
        %v534 = vpop.permute.xlu0 %533
        %535 = vrot.lane.b32.xlu0 %v460, 16
        %v536 = vpop.permute.xlu0 %535
        %537 = vrot.lane.b32.xlu0 %v474, 16
        %v538 = vpop.permute.xlu0 %537
        %539 = vrot.lane.b32.xlu0 %v488, 16
        %v540 = vpop.permute.xlu0 %539
        %541 = vrot.lane.b32.xlu0 %v502, 16
        %v542 = vpop.permute.xlu0 %541
        %543 = vrot.lane.b32.xlu0 %v516, 16
        %v544 = vpop.permute.xlu0 %543
        %545 = vrot.lane.b32.xlu0 %v530, 16
        %v546 = vpop.permute.xlu0 %545
        %vm555 = vcmask 191616
        %556 = vst.msk [vmem:[#allocation2] sm:$0xf] %vm555, %v532
        %557 = vst.msk [vmem:[#allocation2 + $0x4] sm:$0xf] %vm555, %v534
        %558 = vst.msk [vmem:[#allocation2 + $0x8] sm:$0xf] %vm555, %v536
        %559 = vst.msk [vmem:[#allocation2 + $0xc] sm:$0xf] %vm555, %v538
        %560 = vst.msk [vmem:[#allocation2 + $0x10] sm:$0xf] %vm555, %v540
        %561 = vst.msk [vmem:[#allocation2 + $0x14] sm:$0xf] %vm555, %v542
        %562 = vst.msk [vmem:[#allocation2 + $0x18] sm:$0xf] %vm555, %v544
        %563 = vst.msk [vmem:[#allocation2 + $0x1c] sm:$0xf] %vm555, %v546
        %s564 = scalar_lea.vmem %s321, 144
        %v565 = vld [vmem:[%s564] sm:$0xf]
        %v566 = vld [vmem:[%s564 + $0x8] sm:$0xf]
        %v567 = vld [vmem:[%s564 + $0x10] sm:$0xf]
        %v568 = vld [vmem:[%s564 + $0x18] sm:$0xf]
        %v569 = vld [vmem:[%s564 + $0x20] sm:$0xf]
        %v570 = vld [vmem:[%s564 + $0x28] sm:$0xf]
        %v571 = vld [vmem:[%s564 + $0x30] sm:$0xf]
        %v572 = vld [vmem:[%s564 + $0x38] sm:$0xf]
        %581 = vrot.lane.b32.xlu0 %v565, 24
        %v582 = vpop.permute.xlu0 %581
        %583 = vrot.lane.b32.xlu0 %v566, 24
        %v584 = vpop.permute.xlu0 %583
        %585 = vrot.lane.b32.xlu0 %v567, 24
        %v586 = vpop.permute.xlu0 %585
        %587 = vrot.lane.b32.xlu0 %v568, 24
        %v588 = vpop.permute.xlu0 %587
        %589 = vrot.lane.b32.xlu0 %v569, 24
        %v590 = vpop.permute.xlu0 %589
        %591 = vrot.lane.b32.xlu0 %v570, 24
        %v592 = vpop.permute.xlu0 %591
        %593 = vrot.lane.b32.xlu0 %v571, 24
        %v594 = vpop.permute.xlu0 %593
        %595 = vrot.lane.b32.xlu0 %v572, 24
        %v596 = vpop.permute.xlu0 %595
        %vm605 = vcmask 257216
        %606 = vst.msk [vmem:[#allocation2] sm:$0xf] %vm605, %v582
        %607 = vst.msk [vmem:[#allocation2 + $0x4] sm:$0xf] %vm605, %v584
        %608 = vst.msk [vmem:[#allocation2 + $0x8] sm:$0xf] %vm605, %v586
        %609 = vst.msk [vmem:[#allocation2 + $0xc] sm:$0xf] %vm605, %v588
        %610 = vst.msk [vmem:[#allocation2 + $0x10] sm:$0xf] %vm605, %v590
        %611 = vst.msk [vmem:[#allocation2 + $0x14] sm:$0xf] %vm605, %v592
        %612 = vst.msk [vmem:[#allocation2 + $0x18] sm:$0xf] %vm605, %v594
        %613 = vst.msk [vmem:[#allocation2 + $0x1c] sm:$0xf] %vm605, %v596
        %s614 = scalar_lea.vmem %s321, 216
        %v615 = vld [vmem:[%s614] sm:$0xf]
        %v616 = vld [vmem:[%s614 + $0x8] sm:$0xf]
        %v617 = vld [vmem:[%s614 + $0x10] sm:$0xf]
        %v618 = vld [vmem:[%s614 + $0x18] sm:$0xf]
        %v619 = vld [vmem:[%s614 + $0x20] sm:$0xf]
        %v620 = vld [vmem:[%s614 + $0x28] sm:$0xf]
        %v621 = vld [vmem:[%s614 + $0x30] sm:$0xf]
        %v622 = vld [vmem:[%s614 + $0x38] sm:$0xf]
        %631 = vrot.lane.b32.xlu0 %v615, 32
        %v632 = vpop.permute.xlu0 %631
        %633 = vrot.lane.b32.xlu0 %v616, 32
        %v634 = vpop.permute.xlu0 %633
        %635 = vrot.lane.b32.xlu0 %v617, 32
        %v636 = vpop.permute.xlu0 %635
        %637 = vrot.lane.b32.xlu0 %v618, 32
        %v638 = vpop.permute.xlu0 %637
        %639 = vrot.lane.b32.xlu0 %v619, 32
        %v640 = vpop.permute.xlu0 %639
        %641 = vrot.lane.b32.xlu0 %v620, 32
        %v642 = vpop.permute.xlu0 %641
        %643 = vrot.lane.b32.xlu0 %v621, 32
        %v644 = vpop.permute.xlu0 %643
        %645 = vrot.lane.b32.xlu0 %v622, 32
        %v646 = vpop.permute.xlu0 %645
        %vm655 = vcmask 322816
        %656 = vst.msk [vmem:[#allocation2] sm:$0xf] %vm655, %v632
        %657 = vst.msk [vmem:[#allocation2 + $0x4] sm:$0xf] %vm655, %v634
        %658 = vst.msk [vmem:[#allocation2 + $0x8] sm:$0xf] %vm655, %v636
        %659 = vst.msk [vmem:[#allocation2 + $0xc] sm:$0xf] %vm655, %v638
        %660 = vst.msk [vmem:[#allocation2 + $0x10] sm:$0xf] %vm655, %v640
        %661 = vst.msk [vmem:[#allocation2 + $0x14] sm:$0xf] %vm655, %v642
        %662 = vst.msk [vmem:[#allocation2 + $0x18] sm:$0xf] %vm655, %v644
        %663 = vst.msk [vmem:[#allocation2 + $0x1c] sm:$0xf] %vm655, %v646
        %v664 = vld [vmem:[%s564] sm:$0xf]
        %v665 = vld [vmem:[%s564 + $0x4] sm:$0x1]
        %v666 = vld [vmem:[%s564 + $0x8] sm:$0xf]
        %v667 = vld [vmem:[%s564 + $0xc] sm:$0x1]
        %v668 = vld [vmem:[%s564 + $0x10] sm:$0xf]
        %v669 = vld [vmem:[%s564 + $0x14] sm:$0x1]
        %v670 = vld [vmem:[%s564 + $0x18] sm:$0xf]
        %v671 = vld [vmem:[%s564 + $0x1c] sm:$0x1]
        %v672 = vld [vmem:[%s564 + $0x20] sm:$0xf]
        %v673 = vld [vmem:[%s564 + $0x24] sm:$0x1]
        %v674 = vld [vmem:[%s564 + $0x28] sm:$0xf]
        %v675 = vld [vmem:[%s564 + $0x2c] sm:$0x1]
        %v676 = vld [vmem:[%s564 + $0x30] sm:$0xf]
        %v677 = vld [vmem:[%s564 + $0x34] sm:$0x1]
        %v678 = vld [vmem:[%s564 + $0x38] sm:$0xf]
        %v679 = vld [vmem:[%s564 + $0x3c] sm:$0x1]
        %v681 = vshrl.u32 %v664, 16
        %v683 = vrot.slane %v681, 4
        %v684 = vshll.u32 %v664, 16
        %v686 = vrot.slane %v684, 5
        %v687 = vor.u32 %v683, %v686
        %v688 = vrot.slane %v687, 4
        %v690 = vshll.u32 %v665, 16
        %v692 = vrot.slane %v690, 5
        %v693 = vsel %vm418, %v688, %v692
        %v695 = vshrl.u32 %v666, 16
        %v697 = vrot.slane %v695, 4
        %v698 = vshll.u32 %v666, 16
        %v700 = vrot.slane %v698, 5
        %v701 = vor.u32 %v697, %v700
        %v702 = vrot.slane %v701, 4
        %v704 = vshll.u32 %v667, 16
        %v706 = vrot.slane %v704, 5
        %v707 = vsel %vm418, %v702, %v706
        %v709 = vshrl.u32 %v668, 16
        %v711 = vrot.slane %v709, 4
        %v712 = vshll.u32 %v668, 16
        %v714 = vrot.slane %v712, 5
        %v715 = vor.u32 %v711, %v714
        %v716 = vrot.slane %v715, 4
        %v718 = vshll.u32 %v669, 16
        %v720 = vrot.slane %v718, 5
        %v721 = vsel %vm418, %v716, %v720
        %v723 = vshrl.u32 %v670, 16
        %v725 = vrot.slane %v723, 4
        %v726 = vshll.u32 %v670, 16
        %v728 = vrot.slane %v726, 5
        %v729 = vor.u32 %v725, %v728
        %v730 = vrot.slane %v729, 4
        %v732 = vshll.u32 %v671, 16
        %v734 = vrot.slane %v732, 5
        %v735 = vsel %vm418, %v730, %v734
        %v737 = vshrl.u32 %v672, 16
        %v739 = vrot.slane %v737, 4
        %v740 = vshll.u32 %v672, 16
        %v742 = vrot.slane %v740, 5
        %v743 = vor.u32 %v739, %v742
        %v744 = vrot.slane %v743, 4
        %v746 = vshll.u32 %v673, 16
        %v748 = vrot.slane %v746, 5
        %v749 = vsel %vm418, %v744, %v748
        %v751 = vshrl.u32 %v674, 16
        %v753 = vrot.slane %v751, 4
        %v754 = vshll.u32 %v674, 16
        %v756 = vrot.slane %v754, 5
        %v757 = vor.u32 %v753, %v756
        %v758 = vrot.slane %v757, 4
        %v760 = vshll.u32 %v675, 16
        %v762 = vrot.slane %v760, 5
        %v763 = vsel %vm418, %v758, %v762
        %v765 = vshrl.u32 %v676, 16
        %v767 = vrot.slane %v765, 4
        %v768 = vshll.u32 %v676, 16
        %v770 = vrot.slane %v768, 5
        %v771 = vor.u32 %v767, %v770
        %v772 = vrot.slane %v771, 4
        %v774 = vshll.u32 %v677, 16
        %v776 = vrot.slane %v774, 5
        %v777 = vsel %vm418, %v772, %v776
        %v779 = vshrl.u32 %v678, 16
        %v781 = vrot.slane %v779, 4
        %v782 = vshll.u32 %v678, 16
        %v784 = vrot.slane %v782, 5
        %v785 = vor.u32 %v781, %v784
        %v786 = vrot.slane %v785, 4
        %v788 = vshll.u32 %v679, 16
        %v790 = vrot.slane %v788, 5
        %v791 = vsel %vm418, %v786, %v790
        %792 = vrot.lane.b32.xlu0 %v693, 40
        %v793 = vpop.permute.xlu0 %792
        %794 = vrot.lane.b32.xlu0 %v707, 40
        %v795 = vpop.permute.xlu0 %794
        %796 = vrot.lane.b32.xlu0 %v721, 40
        %v797 = vpop.permute.xlu0 %796
        %798 = vrot.lane.b32.xlu0 %v735, 40
        %v799 = vpop.permute.xlu0 %798
        %800 = vrot.lane.b32.xlu0 %v749, 40
        %v801 = vpop.permute.xlu0 %800
        %802 = vrot.lane.b32.xlu0 %v763, 40
        %v803 = vpop.permute.xlu0 %802
        %804 = vrot.lane.b32.xlu0 %v777, 40
        %v805 = vpop.permute.xlu0 %804
        %806 = vrot.lane.b32.xlu0 %v791, 40
        %v807 = vpop.permute.xlu0 %806
        %vm816 = vcmask 388416
        %817 = vst.msk [vmem:[#allocation2] sm:$0xf] %vm816, %v793
        %818 = vst.msk [vmem:[#allocation2 + $0x4] sm:$0xf] %vm816, %v795
        %819 = vst.msk [vmem:[#allocation2 + $0x8] sm:$0xf] %vm816, %v797
        %820 = vst.msk [vmem:[#allocation2 + $0xc] sm:$0xf] %vm816, %v799
        %821 = vst.msk [vmem:[#allocation2 + $0x10] sm:$0xf] %vm816, %v801
        %822 = vst.msk [vmem:[#allocation2 + $0x14] sm:$0xf] %vm816, %v803
        %823 = vst.msk [vmem:[#allocation2 + $0x18] sm:$0xf] %vm816, %v805
        %824 = vst.msk [vmem:[#allocation2 + $0x1c] sm:$0xf] %vm816, %v807
        %s825 = scalar_lea.vmem %s321, 8
        %v826 = vld [vmem:[%s825] sm:$0xf]
        %v827 = vld [vmem:[%s825 + $0x8] sm:$0xf]
        %v828 = vld [vmem:[%s825 + $0x10] sm:$0xf]
        %v829 = vld [vmem:[%s825 + $0x18] sm:$0xf]
        %v830 = vld [vmem:[%s825 + $0x20] sm:$0xf]
        %v831 = vld [vmem:[%s825 + $0x28] sm:$0xf]
        %v832 = vld [vmem:[%s825 + $0x30] sm:$0xf]
        %v833 = vld [vmem:[%s825 + $0x38] sm:$0xf]
        %842 = vrot.lane.b32.xlu0 %v826, 48
        %v843 = vpop.permute.xlu0 %842
        %844 = vrot.lane.b32.xlu0 %v827, 48
        %v845 = vpop.permute.xlu0 %844
        %846 = vrot.lane.b32.xlu0 %v828, 48
        %v847 = vpop.permute.xlu0 %846
        %848 = vrot.lane.b32.xlu0 %v829, 48
        %v849 = vpop.permute.xlu0 %848
        %850 = vrot.lane.b32.xlu0 %v830, 48
        %v851 = vpop.permute.xlu0 %850
        %852 = vrot.lane.b32.xlu0 %v831, 48
        %v853 = vpop.permute.xlu0 %852
        %854 = vrot.lane.b32.xlu0 %v832, 48
        %v855 = vpop.permute.xlu0 %854
        %856 = vrot.lane.b32.xlu0 %v833, 48
        %v857 = vpop.permute.xlu0 %856
        %vm866 = vcmask 454016
        %867 = vst.msk [vmem:[#allocation2] sm:$0xf] %vm866, %v843
        %868 = vst.msk [vmem:[#allocation2 + $0x4] sm:$0xf] %vm866, %v845
        %869 = vst.msk [vmem:[#allocation2 + $0x8] sm:$0xf] %vm866, %v847
        %870 = vst.msk [vmem:[#allocation2 + $0xc] sm:$0xf] %vm866, %v849
        %871 = vst.msk [vmem:[#allocation2 + $0x10] sm:$0xf] %vm866, %v851
        %872 = vst.msk [vmem:[#allocation2 + $0x14] sm:$0xf] %vm866, %v853
        %873 = vst.msk [vmem:[#allocation2 + $0x18] sm:$0xf] %vm866, %v855
        %874 = vst.msk [vmem:[#allocation2 + $0x1c] sm:$0xf] %vm866, %v857
        %s875 = scalar_lea.vmem %s321, 80
        %v876 = vld [vmem:[%s875] sm:$0xf]
        %v877 = vld [vmem:[%s875 + $0x8] sm:$0xf]
        %v878 = vld [vmem:[%s875 + $0x10] sm:$0xf]
        %v879 = vld [vmem:[%s875 + $0x18] sm:$0xf]
        %v880 = vld [vmem:[%s875 + $0x20] sm:$0xf]
        %v881 = vld [vmem:[%s875 + $0x28] sm:$0xf]
        %v882 = vld [vmem:[%s875 + $0x30] sm:$0xf]
        %v883 = vld [vmem:[%s875 + $0x38] sm:$0xf]
        %892 = vrot.lane.b32.xlu0 %v876, 56
        %v893 = vpop.permute.xlu0 %892
        %894 = vrot.lane.b32.xlu0 %v877, 56
        %v895 = vpop.permute.xlu0 %894
        %896 = vrot.lane.b32.xlu0 %v878, 56
        %v897 = vpop.permute.xlu0 %896
        %898 = vrot.lane.b32.xlu0 %v879, 56
        %v899 = vpop.permute.xlu0 %898
        %900 = vrot.lane.b32.xlu0 %v880, 56
        %v901 = vpop.permute.xlu0 %900
        %902 = vrot.lane.b32.xlu0 %v881, 56
        %v903 = vpop.permute.xlu0 %902
        %904 = vrot.lane.b32.xlu0 %v882, 56
        %v905 = vpop.permute.xlu0 %904
        %906 = vrot.lane.b32.xlu0 %v883, 56
        %v907 = vpop.permute.xlu0 %906
        %vm916 = vcmask 519616
        %917 = vst.msk [vmem:[#allocation2] sm:$0xf] %vm916, %v893
        %918 = vst.msk [vmem:[#allocation2 + $0x4] sm:$0xf] %vm916, %v895
        %919 = vst.msk [vmem:[#allocation2 + $0x8] sm:$0xf] %vm916, %v897
        %920 = vst.msk [vmem:[#allocation2 + $0xc] sm:$0xf] %vm916, %v899
        %921 = vst.msk [vmem:[#allocation2 + $0x10] sm:$0xf] %vm916, %v901
        %922 = vst.msk [vmem:[#allocation2 + $0x14] sm:$0xf] %vm916, %v903
        %923 = vst.msk [vmem:[#allocation2 + $0x18] sm:$0xf] %vm916, %v905
        %924 = vst.msk [vmem:[#allocation2 + $0x1c] sm:$0xf] %vm916, %v907
        %v925 = vld [vmem:[%s825] sm:$0xf]
        %v926 = vld [vmem:[%s825 + $0x4] sm:$0x1]
        %v927 = vld [vmem:[%s825 + $0x8] sm:$0xf]
        %v928 = vld [vmem:[%s825 + $0xc] sm:$0x1]
        %v929 = vld [vmem:[%s825 + $0x10] sm:$0xf]
        %v930 = vld [vmem:[%s825 + $0x14] sm:$0x1]
        %v931 = vld [vmem:[%s825 + $0x18] sm:$0xf]
        %v932 = vld [vmem:[%s825 + $0x1c] sm:$0x1]
        %v933 = vld [vmem:[%s825 + $0x20] sm:$0xf]
        %v934 = vld [vmem:[%s825 + $0x24] sm:$0x1]
        %v935 = vld [vmem:[%s825 + $0x28] sm:$0xf]
        %v936 = vld [vmem:[%s825 + $0x2c] sm:$0x1]
        %v937 = vld [vmem:[%s825 + $0x30] sm:$0xf]
        %v938 = vld [vmem:[%s825 + $0x34] sm:$0x1]
        %v939 = vld [vmem:[%s825 + $0x38] sm:$0xf]
        %v940 = vld [vmem:[%s825 + $0x3c] sm:$0x1]
        %v942 = vshrl.u32 %v925, 16
        %v944 = vrot.slane %v942, 4
        %v945 = vshll.u32 %v925, 16
        %v947 = vrot.slane %v945, 5
        %v948 = vor.u32 %v944, %v947
        %v949 = vrot.slane %v948, 4
        %v951 = vshll.u32 %v926, 16
        %v953 = vrot.slane %v951, 5
        %v954 = vsel %vm418, %v949, %v953
        %v956 = vshrl.u32 %v927, 16
        %v958 = vrot.slane %v956, 4
        %v959 = vshll.u32 %v927, 16
        %v961 = vrot.slane %v959, 5
        %v962 = vor.u32 %v958, %v961
        %v963 = vrot.slane %v962, 4
        %v965 = vshll.u32 %v928, 16
        %v967 = vrot.slane %v965, 5
        %v968 = vsel %vm418, %v963, %v967
        %v970 = vshrl.u32 %v929, 16
        %v972 = vrot.slane %v970, 4
        %v973 = vshll.u32 %v929, 16
        %v975 = vrot.slane %v973, 5
        %v976 = vor.u32 %v972, %v975
        %v977 = vrot.slane %v976, 4
        %v979 = vshll.u32 %v930, 16
        %v981 = vrot.slane %v979, 5
        %v982 = vsel %vm418, %v977, %v981
        %v984 = vshrl.u32 %v931, 16
        %v986 = vrot.slane %v984, 4
        %v987 = vshll.u32 %v931, 16
        %v989 = vrot.slane %v987, 5
        %v990 = vor.u32 %v986, %v989
        %v991 = vrot.slane %v990, 4
        %v993 = vshll.u32 %v932, 16
        %v995 = vrot.slane %v993, 5
        %v996 = vsel %vm418, %v991, %v995
        %v998 = vshrl.u32 %v933, 16
        %v1000 = vrot.slane %v998, 4
        %v1001 = vshll.u32 %v933, 16
        %v1003 = vrot.slane %v1001, 5
        %v1004 = vor.u32 %v1000, %v1003
        %v1005 = vrot.slane %v1004, 4
        %v1007 = vshll.u32 %v934, 16
        %v1009 = vrot.slane %v1007, 5
        %v1010 = vsel %vm418, %v1005, %v1009
        %v1012 = vshrl.u32 %v935, 16
        %v1014 = vrot.slane %v1012, 4
        %v1015 = vshll.u32 %v935, 16
        %v1017 = vrot.slane %v1015, 5
        %v1018 = vor.u32 %v1014, %v1017
        %v1019 = vrot.slane %v1018, 4
        %v1021 = vshll.u32 %v936, 16
        %v1023 = vrot.slane %v1021, 5
        %v1024 = vsel %vm418, %v1019, %v1023
        %v1026 = vshrl.u32 %v937, 16
        %v1028 = vrot.slane %v1026, 4
        %v1029 = vshll.u32 %v937, 16
        %v1031 = vrot.slane %v1029, 5
        %v1032 = vor.u32 %v1028, %v1031
        %v1033 = vrot.slane %v1032, 4
        %v1035 = vshll.u32 %v938, 16
        %v1037 = vrot.slane %v1035, 5
        %v1038 = vsel %vm418, %v1033, %v1037
        %v1040 = vshrl.u32 %v939, 16
        %v1042 = vrot.slane %v1040, 4
        %v1043 = vshll.u32 %v939, 16
        %v1045 = vrot.slane %v1043, 5
        %v1046 = vor.u32 %v1042, %v1045
        %v1047 = vrot.slane %v1046, 4
        %v1049 = vshll.u32 %v940, 16
        %v1051 = vrot.slane %v1049, 5
        %v1052 = vsel %vm418, %v1047, %v1051
        %1053 = vrot.lane.b32.xlu0 %v954, 64
        %v1054 = vpop.permute.xlu0 %1053
        %1055 = vrot.lane.b32.xlu0 %v968, 64
        %v1056 = vpop.permute.xlu0 %1055
        %1057 = vrot.lane.b32.xlu0 %v982, 64
        %v1058 = vpop.permute.xlu0 %1057
        %1059 = vrot.lane.b32.xlu0 %v996, 64
        %v1060 = vpop.permute.xlu0 %1059
        %1061 = vrot.lane.b32.xlu0 %v1010, 64
        %v1062 = vpop.permute.xlu0 %1061
        %1063 = vrot.lane.b32.xlu0 %v1024, 64
        %v1064 = vpop.permute.xlu0 %1063
        %1065 = vrot.lane.b32.xlu0 %v1038, 64
        %v1066 = vpop.permute.xlu0 %1065
        %1067 = vrot.lane.b32.xlu0 %v1052, 64
        %v1068 = vpop.permute.xlu0 %1067
        %vm1077 = vcmask 585216
        %1078 = vst.msk [vmem:[#allocation2] sm:$0xf] %vm1077, %v1054
        %1079 = vst.msk [vmem:[#allocation2 + $0x4] sm:$0xf] %vm1077, %v1056
        %1080 = vst.msk [vmem:[#allocation2 + $0x8] sm:$0xf] %vm1077, %v1058
        %1081 = vst.msk [vmem:[#allocation2 + $0xc] sm:$0xf] %vm1077, %v1060
        %1082 = vst.msk [vmem:[#allocation2 + $0x10] sm:$0xf] %vm1077, %v1062
        %1083 = vst.msk [vmem:[#allocation2 + $0x14] sm:$0xf] %vm1077, %v1064
        %1084 = vst.msk [vmem:[#allocation2 + $0x18] sm:$0xf] %vm1077, %v1066
        %1085 = vst.msk [vmem:[#allocation2 + $0x1c] sm:$0xf] %vm1077, %v1068
        %v1086 = vld [vmem:[#allocation2] sm:$0xf]
        %v1087 = vld [vmem:[#allocation2 + $0x4] sm:$0xf]
        %v1088 = vld [vmem:[#allocation2 + $0x8] sm:$0xf]
        %v1089 = vld [vmem:[#allocation2 + $0xc] sm:$0xf]
        %v1090 = vld [vmem:[#allocation2 + $0x10] sm:$0xf]
        %v1091 = vld [vmem:[#allocation2 + $0x14] sm:$0xf]
        %v1092 = vld [vmem:[#allocation2 + $0x18] sm:$0xf]
        %v1093 = vld [vmem:[#allocation2 + $0x1c] sm:$0xf]
        %v1094 = vld [vmem:[%s1] sm:$0xff]
        %v1095 = vld [vmem:[%s1 + $0x8] sm:$0xff]
        %v1096 = vld [vmem:[%s1 + $0x10] sm:$0xff]
        %v1097 = vld [vmem:[%s1 + $0x18] sm:$0xff]
        %v1098 = vld [vmem:[%s1 + $0x20] sm:$0xff]
        %v1099 = vld [vmem:[%s1 + $0x28] sm:$0xff]
        %v1100 = vld [vmem:[%s1 + $0x30] sm:$0xff]
        %v1101 = vld [vmem:[%s1 + $0x38] sm:$0xff]
        %v1102 = vld [vmem:[%s1 + $0x40] sm:$0xff]
        %v1103 = vld [vmem:[%s1 + $0x48] sm:$0xff]
        %v1104 = vld [vmem:[%s1 + $0x50] sm:$0xff]
        %v1105 = vld [vmem:[%s1 + $0x58] sm:$0xff]
        %v1106 = vld [vmem:[%s1 + $0x60] sm:$0xff]
        %v1107 = vld [vmem:[%s1 + $0x68] sm:$0xff]
        %v1108 = vld [vmem:[%s1 + $0x70] sm:$0xff]
        %v1109 = vld [vmem:[%s1 + $0x78] sm:$0xff]
        %v1118 = vunpack.c.l.b16 %v1086
        %v1119 = vunpack.c.l.b16 %v1087
        %v1120 = vunpack.c.l.b16 %v1088
        %v1121 = vunpack.c.l.b16 %v1089
        %v1122 = vunpack.c.l.b16 %v1090
        %v1123 = vunpack.c.l.b16 %v1091
        %v1124 = vunpack.c.l.b16 %v1092
        %v1125 = vunpack.c.l.b16 %v1093
        %v1126 = vpack.c.b16 %v1119, %v1118
        %v1127 = vpack.c.b16 %v1121, %v1120
        %v1128 = vpack.c.b16 %v1123, %v1122
        %v1129 = vpack.c.b16 %v1125, %v1124
        %v1150 = vunpack.c.l.b16 %v1094
        %v1151 = vunpack.c.h.b16 %v1094
        %v1152 = vunpack.c.l.b16 %v1095
        %v1153 = vunpack.c.h.b16 %v1095
        %v1154 = vunpack.c.l.b16 %v1096
        %v1155 = vunpack.c.h.b16 %v1096
        %v1156 = vunpack.c.l.b16 %v1097
        %v1157 = vunpack.c.h.b16 %v1097
        %v1158 = vunpack.c.l.b16 %v1098
        %v1159 = vunpack.c.h.b16 %v1098
        %v1160 = vunpack.c.l.b16 %v1099
        %v1161 = vunpack.c.h.b16 %v1099
        %v1162 = vunpack.c.l.b16 %v1100
        %v1163 = vunpack.c.h.b16 %v1100
        %v1164 = vunpack.c.l.b16 %v1101
        %v1165 = vunpack.c.h.b16 %v1101
        %v1166 = vunpack.c.l.b16 %v1102
        %v1167 = vunpack.c.h.b16 %v1102
        %v1168 = vunpack.c.l.b16 %v1103
        %v1169 = vunpack.c.h.b16 %v1103
        %v1170 = vunpack.c.l.b16 %v1104
        %v1171 = vunpack.c.h.b16 %v1104
        %v1172 = vunpack.c.l.b16 %v1105
        %v1173 = vunpack.c.h.b16 %v1105
        %v1174 = vunpack.c.l.b16 %v1106
        %v1175 = vunpack.c.h.b16 %v1106
        %v1176 = vunpack.c.l.b16 %v1107
        %v1177 = vunpack.c.h.b16 %v1107
        %v1178 = vunpack.c.l.b16 %v1108
        %v1179 = vunpack.c.h.b16 %v1108
        %v1180 = vunpack.c.l.b16 %v1109
        %v1181 = vunpack.c.h.b16 %v1109
        %v1182 = vpack.c.b16 %v1152, %v1150
        %v1183 = vpack.c.b16 %v1153, %v1151
        %v1184 = vpack.c.b16 %v1156, %v1154
        %v1185 = vpack.c.b16 %v1157, %v1155
        %v1186 = vpack.c.b16 %v1160, %v1158
        %v1187 = vpack.c.b16 %v1161, %v1159
        %v1188 = vpack.c.b16 %v1164, %v1162
        %v1189 = vpack.c.b16 %v1165, %v1163
        %v1190 = vpack.c.b16 %v1168, %v1166
        %v1191 = vpack.c.b16 %v1169, %v1167
        %v1192 = vpack.c.b16 %v1172, %v1170
        %v1193 = vpack.c.b16 %v1173, %v1171
        %v1194 = vpack.c.b16 %v1176, %v1174
        %v1195 = vpack.c.b16 %v1177, %v1175
        %v1196 = vpack.c.b16 %v1180, %v1178
        %v1197 = vpack.c.b16 %v1181, %v1179
        %1214 = vmatprep.subr.bf16.mxu0 %v1197
        %1215 = vmatpush1.bf16.msra.mxu0 %v1196
        %1216 = vmatprep.subr.bf16.mxu0 %v1195
        %1217 = vmatpush1.bf16.msra.mxu0 %v1194
        %1218 = vmatprep.subr.bf16.mxu0 %v1193
        %1219 = vmatpush1.bf16.msra.mxu0 %v1192
        %1220 = vmatprep.subr.bf16.mxu0 %v1191
        %1221 = vmatpush1.bf16.msra.mxu0 %v1190
        %1222 = vmatprep.subr.bf16.mxu0 %v1189
        %1223 = vmatpush1.bf16.msra.mxu0 %v1188
        %1224 = vmatprep.subr.bf16.mxu0 %v1187
        %1225 = vmatpush1.bf16.msra.mxu0 %v1186
        %1226 = vmatprep.subr.bf16.mxu0 %v1185
        %1227 = vmatpush1.bf16.msra.mxu0 %v1184
        %1228 = vmatprep.subr.bf16.mxu0 %v1183
        %1229 = vmatpush1.bf16.msra.mxu0 %v1182
        %1230 = vmatprep.subr.bf16.mxu0 0
        %1231 = vmatpush2.bf16.msra.mxu0 0
        %1232 = vmatprep.subr.bf16.mxu0 0
        %1233 = vmatpush2.bf16.msra.mxu0 0
        %1234 = vmatprep.subr.bf16.mxu0 0
        %1235 = vmatpush2.bf16.msra.mxu0 0
        %1236 = vmatprep.subr.bf16.mxu0 0
        %1237 = vmatpush2.bf16.msra.mxu0 0
        %1238 = vmatprep.subr.bf16.mxu0 0
        %1239 = vmatpush2.bf16.msra.mxu0 0
        %1240 = vmatprep.subr.bf16.mxu0 0
        %1241 = vmatpush2.bf16.msra.mxu0 0
        %1242 = vmatprep.subr.bf16.mxu0 0
        %1243 = vmatpush2.bf16.msra.mxu0 0
        %1244 = vmatprep.subr.bf16.mxu0 0
        %1245 = vmatpush2.bf16.msra.mxu0 0
        %1246 = vmatprep.mubr.bf16.mxu0 0
        %1247 = vmatmul.mubr.bf16.gmra.mxu0 %v1126
        %v1248 = vpop.f32.mrf.mxu0
        %v1249 = vadd.f32 0.0, %v1248
        %v1250 = vpop.f32.mrf.mxu0
        %v1251 = vadd.f32 0.0, %v1250
        %v1252 = vpop.f32.mrf.mxu0
        %v1253 = vadd.f32 0.0, %v1252
        %v1254 = vpop.f32.mrf.mxu0
        %v1255 = vadd.f32 0.0, %v1254
        %1256 = vmatprep.mubr.bf16.mxu0 0
        %1257 = vmatmul.mubr.bf16.gmra.mxu0 %v1127
        %v1258 = vpop.f32.mrf.mxu0
        %v1259 = vadd.f32 0.0, %v1258
        %v1260 = vpop.f32.mrf.mxu0
        %v1261 = vadd.f32 0.0, %v1260
        %v1262 = vpop.f32.mrf.mxu0
        %v1263 = vadd.f32 0.0, %v1262
        %v1264 = vpop.f32.mrf.mxu0
        %v1265 = vadd.f32 0.0, %v1264
        %1266 = vmatprep.mubr.bf16.mxu0 0
        %1267 = vmatmul.mubr.bf16.gmra.mxu0 %v1128
        %v1268 = vpop.f32.mrf.mxu0
        %v1269 = vadd.f32 0.0, %v1268
        %v1270 = vpop.f32.mrf.mxu0
        %v1271 = vadd.f32 0.0, %v1270
        %v1272 = vpop.f32.mrf.mxu0
        %v1273 = vadd.f32 0.0, %v1272
        %v1274 = vpop.f32.mrf.mxu0
        %v1275 = vadd.f32 0.0, %v1274
        %1276 = vmatprep.mubr.bf16.mxu0 0
        %1277 = vmatmul.mubr.bf16.gmra.mxu0 %v1129
        %v1278 = vpop.f32.mrf.mxu0
        %v1279 = vadd.f32 0.0, %v1278
        %v1280 = vpop.f32.mrf.mxu0
        %v1281 = vadd.f32 0.0, %v1280
        %v1282 = vpop.f32.mrf.mxu0
        %v1283 = vadd.f32 0.0, %v1282
        %v1284 = vpop.f32.mrf.mxu0
        %v1285 = vadd.f32 0.0, %v1284
        %1286 = vdwg.mxu0
        %v1287 = vpack.c.bf16 %v1253, %v1249
        %v1288 = vpack.c.bf16 %v1263, %v1259
        %v1289 = vpack.c.bf16 %v1273, %v1269
        %v1290 = vpack.c.bf16 %v1283, %v1279
        %v1295 = vunpack.c.l.b16 %v1287
        %v1296 = vunpack.c.h.b16 %v1287
        %v1297 = vunpack.c.l.b16 %v1288
        %v1298 = vunpack.c.h.b16 %v1288
        %v1299 = vunpack.c.l.b16 %v1289
        %v1300 = vunpack.c.h.b16 %v1289
        %v1301 = vunpack.c.l.b16 %v1290
        %v1302 = vunpack.c.h.b16 %v1290
        %v1303 = vpack.c.b16 %v1295, %v1295
        %v1304 = vpack.c.b16 %v1296, %v1296
        %v1305 = vpack.c.b16 %v1297, %v1297
        %v1306 = vpack.c.b16 %v1298, %v1298
        %v1307 = vpack.c.b16 %v1299, %v1299
        %v1308 = vpack.c.b16 %v1300, %v1300
        %v1309 = vpack.c.b16 %v1301, %v1301
        %v1310 = vpack.c.b16 %v1302, %v1302
        %1319 = vst [vmem:[%s284] sm:$0xf] %v1303
        %1320 = vst [vmem:[%s284 + $0x4] sm:$0xf] %v1304
        %1321 = vst [vmem:[%s284 + $0x8] sm:$0xf] %v1305
        %1322 = vst [vmem:[%s284 + $0xc] sm:$0xf] %v1306
        %1323 = vst [vmem:[%s284 + $0x10] sm:$0xf] %v1307
        %1324 = vst [vmem:[%s284 + $0x14] sm:$0xf] %v1308
        %1325 = vst [vmem:[%s284 + $0x18] sm:$0xf] %v1309
        %1326 = vst [vmem:[%s284 + $0x1c] sm:$0xf] %v1310
        %v1327 = vadd.f32 %v1249, %v1253
        %v1328 = vadd.f32 %v1327, %v1259
        %v1329 = vadd.f32 %v1328, %v1263
        %v1330 = vadd.f32 %v1329, %v1269
        %v1331 = vadd.f32 %v1330, %v1273
        %v1332 = vadd.f32 %v1331, %v1279
        %v1333 = vadd.f32 %v1332, %v1283
        %v1334 = vrot.slane %v1333, 4
        %v1335 = vadd.f32 %v1333, %v1334
        %v1336 = vrot.slane %v1335, 2
        %v1337 = vadd.f32 %v1335, %v1336
        %v1338 = vrot.slane %v1337, 1
        %v1339 = vadd.f32 %v1337, %v1338
        %1340 = vst [vmem:[%s297] sm:$0x1] %v1339
        %v1341 = vmul.f32 %v1249, %v1249
        %v1342 = vmul.f32 %v1253, %v1253
        %v1343 = vmul.f32 %v1259, %v1259
        %v1344 = vmul.f32 %v1263, %v1263
        %v1345 = vmul.f32 %v1269, %v1269
        %v1346 = vmul.f32 %v1273, %v1273
        %v1347 = vmul.f32 %v1279, %v1279
        %v1348 = vmul.f32 %v1283, %v1283
        %v1349 = vadd.f32 %v1341, %v1342
        %v1350 = vadd.f32 %v1349, %v1343
        %v1351 = vadd.f32 %v1350, %v1344
        %v1352 = vadd.f32 %v1351, %v1345
        %v1353 = vadd.f32 %v1352, %v1346
        %v1354 = vadd.f32 %v1353, %v1347
        %v1355 = vadd.f32 %v1354, %v1348
        %v1356 = vrot.slane %v1355, 4
        %v1357 = vadd.f32 %v1355, %v1356
        %v1358 = vrot.slane %v1357, 2
        %v1359 = vadd.f32 %v1357, %v1358
        %v1360 = vrot.slane %v1359, 1
        %v1361 = vadd.f32 %v1359, %v1360
        %1362 = vst [vmem:[%s303] sm:$0x1] %v1361
        %v1363 = vpack.c.bf16 %v1255, %v1251
        %v1364 = vpack.c.bf16 %v1265, %v1261
        %v1365 = vpack.c.bf16 %v1275, %v1271
        %v1366 = vpack.c.bf16 %v1285, %v1281
        %v1371 = vunpack.c.l.b16 %v1363
        %v1372 = vunpack.c.h.b16 %v1363
        %v1373 = vunpack.c.l.b16 %v1364
        %v1374 = vunpack.c.h.b16 %v1364
        %v1375 = vunpack.c.l.b16 %v1365
        %v1376 = vunpack.c.h.b16 %v1365
        %v1377 = vunpack.c.l.b16 %v1366
        %v1378 = vunpack.c.h.b16 %v1366
        %v1379 = vpack.c.b16 %v1371, %v1371
        %v1380 = vpack.c.b16 %v1372, %v1372
        %v1381 = vpack.c.b16 %v1373, %v1373
        %v1382 = vpack.c.b16 %v1374, %v1374
        %v1383 = vpack.c.b16 %v1375, %v1375
        %v1384 = vpack.c.b16 %v1376, %v1376
        %v1385 = vpack.c.b16 %v1377, %v1377
        %v1386 = vpack.c.b16 %v1378, %v1378
        %1395 = vst [vmem:[%s291] sm:$0xf] %v1379
        %1396 = vst [vmem:[%s291 + $0x4] sm:$0xf] %v1380
        %1397 = vst [vmem:[%s291 + $0x8] sm:$0xf] %v1381
        %1398 = vst [vmem:[%s291 + $0xc] sm:$0xf] %v1382
        %1399 = vst [vmem:[%s291 + $0x10] sm:$0xf] %v1383
        %1400 = vst [vmem:[%s291 + $0x14] sm:$0xf] %v1384
        %1401 = vst [vmem:[%s291 + $0x18] sm:$0xf] %v1385
        %1402 = vst [vmem:[%s291 + $0x1c] sm:$0xf] %v1386
        %v1403 = vadd.f32 %v1251, %v1255
        %v1404 = vadd.f32 %v1403, %v1261
        %v1405 = vadd.f32 %v1404, %v1265
        %v1406 = vadd.f32 %v1405, %v1271
        %v1407 = vadd.f32 %v1406, %v1275
        %v1408 = vadd.f32 %v1407, %v1281
        %v1409 = vadd.f32 %v1408, %v1285
        %v1410 = vrot.slane %v1409, 4
        %v1411 = vadd.f32 %v1409, %v1410
        %v1412 = vrot.slane %v1411, 2
        %v1413 = vadd.f32 %v1411, %v1412
        %v1414 = vrot.slane %v1413, 1
        %v1415 = vadd.f32 %v1413, %v1414
        %1416 = vst [vmem:[%s309] sm:$0x1] %v1415
        %v1417 = vmul.f32 %v1251, %v1251
        %v1418 = vmul.f32 %v1255, %v1255
        %v1419 = vmul.f32 %v1261, %v1261
        %v1420 = vmul.f32 %v1265, %v1265
        %v1421 = vmul.f32 %v1271, %v1271
        %v1422 = vmul.f32 %v1275, %v1275
        %v1423 = vmul.f32 %v1281, %v1281
        %v1424 = vmul.f32 %v1285, %v1285
        %v1425 = vadd.f32 %v1417, %v1418
        %v1426 = vadd.f32 %v1425, %v1419
        %v1427 = vadd.f32 %v1426, %v1420
        %v1428 = vadd.f32 %v1427, %v1421
        %v1429 = vadd.f32 %v1428, %v1422
        %v1430 = vadd.f32 %v1429, %v1423
        %v1431 = vadd.f32 %v1430, %v1424
        %v1432 = vrot.slane %v1431, 4
        %v1433 = vadd.f32 %v1431, %v1432
        %v1434 = vrot.slane %v1433, 2
        %v1435 = vadd.f32 %v1433, %v1434
        %v1436 = vrot.slane %v1435, 1
        %v1437 = vadd.f32 %v1435, %v1436
        %1438 = vst [vmem:[%s315] sm:$0x1] %v1437
        %s1439 = sand.u32 %s86, 1
        %s1440 = scalar_lea.sflag [#allocation4], %s1439
        %s1441 = sand.u32 %s86, 1
        %s1442 = smul.addr %s1441, 32
        %s1443 = scalar_lea.vmem [#allocation3], %s1442
        %s1444 = sand.u32 %s31, 1
        %s1445 = scalar_lea.sflag [#allocation6], %s1444
        %s1446 = sand.u32 %s112, 1
        %s1447 = smul.addr %s1446, 32
        %s1448 = scalar_lea.vmem [#allocation5], %s1447
        %s1449 = sand.u32 %s31, 1
        %s1450 = scalar_lea.sflag [#allocation6], %s1449
        %s1451 = sand.u32 %s138, 1
        %s1452 = scalar_lea.vmem [#allocation7], %s1451
        %s1453 = sand.u32 %s31, 1
        %s1454 = scalar_lea.sflag [#allocation9], %s1453
        %s1455 = sand.u32 %s164, 1
        %s1456 = scalar_lea.vmem [#allocation8], %s1455
        %s1457 = sand.u32 %s31, 1
        %s1458 = scalar_lea.sflag [#allocation9], %s1457
        %s1459 = sand.u32 %s190, 1
        %s1460 = scalar_lea.vmem [#allocation10], %s1459
        %s1461 = sand.u32 %s216, 1
        %s1462 = scalar_lea.sflag [#allocation12], %s1461
        %s1463 = sand.u32 %s216, 1
        %s1464 = scalar_lea.vmem [#allocation11], %s1463
        // Predicated region
        $region29: #{tpu_custom_call.1} parent=27 // pred_check
          %p1465 = pneg %p96
        $region30: #{tpu_custom_call.1} parent=27 // pred_check_branch
          %1467 = sbr.rel (%p1465) target = $region32
        $region31: #{tpu_custom_call.1} parent=27 // pred_region
          %s1469 = ssub.s32 512, 512
          %1470 = vsyncadd %s1440, %s1469
          %s1471 = smul.addr %s31, 8
          %s1472 = smul.addr %s1471, 64
          %s1473 = scalar_lea.hbm %s2, %s1472
          %s1474 = sshll.u32 %s1443, 4
          %s1475 = int_to_ptr.vmem [resolvable:$true] %s1474
          %1480 = dma.vmem_to_hbm [thread:$0]  %s1475, 512, %s1473, %s1440, 64, 64, 4
        $region32: #{tpu_custom_call.1} parent=27 // pred_fallthru
          _
        // Predicated region
        $region33: #{tpu_custom_call.1} parent=27 // pred_check
          %p1481 = pneg %p122
        $region34: #{tpu_custom_call.1} parent=27 // pred_check_branch
          %1483 = sbr.rel (%p1481) target = $region36
        $region35: #{tpu_custom_call.1} parent=27 // pred_region
          %s1485 = ssub.s32 512, 512
          %1486 = vsyncadd %s1445, %s1485
          %s1487 = smul.addr %s31, 8
          %s1488 = smul.addr %s1487, 64
          %s1489 = scalar_lea.hbm %s3, %s1488
          %s1490 = sshll.u32 %s1448, 4
          %s1491 = int_to_ptr.vmem [resolvable:$true] %s1490
          %1496 = dma.vmem_to_hbm [thread:$0]  %s1491, 512, %s1489, %s1445, 64, 64, 4
        $region36: #{tpu_custom_call.1} parent=27 // pred_fallthru
          _
        // Predicated region
        $region37: #{tpu_custom_call.1} parent=27 // pred_check
          %p1497 = pneg %p148
        $region38: #{tpu_custom_call.1} parent=27 // pred_check_branch
          %1499 = sbr.rel (%p1497) target = $region40
        $region39: #{tpu_custom_call.1} parent=27 // pred_region
          %s1501 = ssub.s32 16, 16
          %1502 = vsyncadd %s1450, %s1501
          %s1503 = smul.addr %s31, 16
          %s1504 = scalar_lea.hbm %s4, %s1503
          %s1506 = sshll.u32 %s1452, 4
          %s1507 = int_to_ptr.vmem [resolvable:$true] %s1506
          %1509 = dma.vmem_to_hbm [thread:$0]  %s1507, 16, %s1504, %s1450
        $region40: #{tpu_custom_call.1} parent=27 // pred_fallthru
          _
        // Predicated region
        $region41: #{tpu_custom_call.1} parent=27 // pred_check
          %p1510 = pneg %p174
        $region42: #{tpu_custom_call.1} parent=27 // pred_check_branch
          %1512 = sbr.rel (%p1510) target = $region44
        $region43: #{tpu_custom_call.1} parent=27 // pred_region
          %s1514 = ssub.s32 16, 16
          %1515 = vsyncadd %s1454, %s1514
          %s1516 = smul.addr %s31, 16
          %s1517 = scalar_lea.hbm %s5, %s1516
          %s1519 = sshll.u32 %s1456, 4
          %s1520 = int_to_ptr.vmem [resolvable:$true] %s1519
          %1522 = dma.vmem_to_hbm [thread:$0]  %s1520, 16, %s1517, %s1454
        $region44: #{tpu_custom_call.1} parent=27 // pred_fallthru
          _
        // Predicated region
        $region45: #{tpu_custom_call.1} parent=27 // pred_check
          %p1523 = pneg %p200
        $region46: #{tpu_custom_call.1} parent=27 // pred_check_branch
          %1525 = sbr.rel (%p1523) target = $region48
        $region47: #{tpu_custom_call.1} parent=27 // pred_region
          %s1527 = ssub.s32 16, 16
          %1528 = vsyncadd %s1458, %s1527
          %s1529 = smul.addr %s31, 16
          %s1530 = scalar_lea.hbm %s6, %s1529
          %s1532 = sshll.u32 %s1460, 4
          %s1533 = int_to_ptr.vmem [resolvable:$true] %s1532
          %1535 = dma.vmem_to_hbm [thread:$0]  %s1533, 16, %s1530, %s1458
        $region48: #{tpu_custom_call.1} parent=27 // pred_fallthru
          _
        // Predicated region
        $region49: #{tpu_custom_call.1} parent=27 // pred_check
          %p1536 = pneg %p226
        $region50: #{tpu_custom_call.1} parent=27 // pred_check_branch
          %1538 = sbr.rel (%p1536) target = $region52
        $region51: #{tpu_custom_call.1} parent=27 // pred_region
          %s1540 = ssub.s32 16, 16
          %1541 = vsyncadd %s1462, %s1540
          %s1542 = smul.addr %s31, 16
          %s1543 = scalar_lea.hbm %s7, %s1542
          %s1545 = sshll.u32 %s1464, 4
          %s1546 = int_to_ptr.vmem [resolvable:$true] %s1545
          %1548 = dma.vmem_to_hbm [thread:$0]  %s1546, 16, %s1543, %s1462
        $region52: #{tpu_custom_call.1} parent=27 // pred_fallthru
          _
      $region28: #{tpu_custom_call.1} parent=5 // pred_fallthru
        _
      %p1549 = scmp.le.s32.totalorder 2, %s26
      // Predicated region
      $region53: #{tpu_custom_call.1} parent=5 // pred_check
        %p1550 = pneg %p1549
      $region54: #{tpu_custom_call.1} parent=5 // pred_check_branch
        %1552 = sbr.rel (%p1550) target = $region56
      $region55: #{tpu_custom_call.1} parent=5 // pred_region
        %s1553 = ssub.s32 %s26, 2
        // Predicated region
        $region57: #{tpu_custom_call.1} parent=55 // pred_check
          %p1554 = pneg %p102
        $region58: #{tpu_custom_call.1} parent=55 // pred_check_branch
          %1556 = sbr.rel (%p1554) target = $region60
        $region59: #{tpu_custom_call.1} parent=55 // pred_region
          %s1557 = sand.u32 %s87, 1
          %s1558 = scalar_lea.sflag [#allocation4], %s1557
          %s1559 = sand.u32 %s87, 1
          %s1560 = smul.addr %s1559, 32
          %s1561 = scalar_lea.vmem [#allocation3], %s1560
          %1562 = dma.done %s1558, 512
        $region60: #{tpu_custom_call.1} parent=55 // pred_fallthru
          _
        // Predicated region
        $region61: #{tpu_custom_call.1} parent=55 // pred_check
          %p1563 = pneg %p128
        $region62: #{tpu_custom_call.1} parent=55 // pred_check_branch
          %1565 = sbr.rel (%p1563) target = $region64
        $region63: #{tpu_custom_call.1} parent=55 // pred_region
          %s1566 = sand.u32 %s32, 1
          %s1567 = scalar_lea.sflag [#allocation6], %s1566
          %s1568 = sand.u32 %s113, 1
          %s1569 = smul.addr %s1568, 32
          %s1570 = scalar_lea.vmem [#allocation5], %s1569
          %1571 = dma.done %s1567, 512
        $region64: #{tpu_custom_call.1} parent=55 // pred_fallthru
          _
        // Predicated region
        $region65: #{tpu_custom_call.1} parent=55 // pred_check
          %p1572 = pneg %p154
        $region66: #{tpu_custom_call.1} parent=55 // pred_check_branch
          %1574 = sbr.rel (%p1572) target = $region68
        $region67: #{tpu_custom_call.1} parent=55 // pred_region
          %s1575 = sand.u32 %s32, 1
          %s1576 = scalar_lea.sflag [#allocation6], %s1575
          %s1577 = sand.u32 %s139, 1
          %s1578 = scalar_lea.vmem [#allocation7], %s1577
          %1579 = dma.done %s1576, 16
        $region68: #{tpu_custom_call.1} parent=55 // pred_fallthru
          _
        // Predicated region
        $region69: #{tpu_custom_call.1} parent=55 // pred_check
          %p1580 = pneg %p180
        $region70: #{tpu_custom_call.1} parent=55 // pred_check_branch
          %1582 = sbr.rel (%p1580) target = $region72
        $region71: #{tpu_custom_call.1} parent=55 // pred_region
          %s1583 = sand.u32 %s32, 1
          %s1584 = scalar_lea.sflag [#allocation9], %s1583
          %s1585 = sand.u32 %s165, 1
          %s1586 = scalar_lea.vmem [#allocation8], %s1585
          %1587 = dma.done %s1584, 16
        $region72: #{tpu_custom_call.1} parent=55 // pred_fallthru
          _
        // Predicated region
        $region73: #{tpu_custom_call.1} parent=55 // pred_check
          %p1588 = pneg %p206
        $region74: #{tpu_custom_call.1} parent=55 // pred_check_branch
          %1590 = sbr.rel (%p1588) target = $region76
        $region75: #{tpu_custom_call.1} parent=55 // pred_region
          %s1591 = sand.u32 %s32, 1
          %s1592 = scalar_lea.sflag [#allocation9], %s1591
          %s1593 = sand.u32 %s191, 1
          %s1594 = scalar_lea.vmem [#allocation10], %s1593
          %1595 = dma.done %s1592, 16
        $region76: #{tpu_custom_call.1} parent=55 // pred_fallthru
          _
        // Predicated region
        $region77: #{tpu_custom_call.1} parent=55 // pred_check
          %p1596 = pneg %p232
        $region78: #{tpu_custom_call.1} parent=55 // pred_check_branch
          %1598 = sbr.rel (%p1596) target = $region80
        $region79: #{tpu_custom_call.1} parent=55 // pred_region
          %s1599 = sand.u32 %s217, 1
          %s1600 = scalar_lea.sflag [#allocation12], %s1599
          %s1601 = sand.u32 %s217, 1
          %s1602 = scalar_lea.vmem [#allocation11], %s1601
          %1603 = dma.done %s1600, 16
        $region80: #{tpu_custom_call.1} parent=55 // pred_fallthru
          _
      $region56: #{tpu_custom_call.1} parent=5 // pred_fallthru
        _
    $region6: #{tpu_custom_call.1} parent=1 // loop_footer
      %s30 = sadd.s32 1, %s26
    $region7: #{tpu_custom_call.1} parent=1 // loop_footer_branch
      %25 = sbr.rel target = $region3
    $region8: #{tpu_custom_call.1} parent=1 // loop_exit
      _
    %1604 = vsyncpa [#allocation4], 1
    %s1605 = scalar_lea.sflag [#allocation4], 1
    %1606 = vsyncpa %s1605, 1
    %1607 = vsyncpa [#allocation6], 1
    %s1608 = scalar_lea.sflag [#allocation6], 1
    %1609 = vsyncpa %s1608, 1
    %1610 = vsyncpa [#allocation9], 1
    %s1611 = scalar_lea.sflag [#allocation9], 1
    %1612 = vsyncpa %s1611, 1
    %1613 = vsyncpa [#allocation12], 1
    %s1614 = scalar_lea.sflag [#allocation12], 1
    %1615 = vsyncpa %s1614, 1

</llo_original>
